<compile_context>
chip_gen: v5e
topology: v5e:2x2
jax: 0.10.0
libtpu: 0.0.40
codegen_flags: <defaults>
</compile_context>

<pallas_src>
import functools

import jax
import jax.numpy as jnp
from jax.experimental import pallas as pl
from jax.experimental.pallas import tpu as pltpu

LATENT_DIM = 64
IMG_DIM = 784
H1, H2, H3 = 128, 256, 512
NEG_SLOPE = 0.1            # matches nn.LeakyReLU(0.1) in the PyTorch module

_LAYER_DIMS = [(LATENT_DIM, H1), (H1, H2), (H2, H3), (H3, IMG_DIM)]


def _leaky_relu(x, neg_slope=NEG_SLOPE):
    return jnp.where(x >= 0, x, neg_slope * x)


def _round_up(n, m):
    return ((n + m - 1) // m) * m


def generator_kernel(x_ref,
                     w1_ref, b1_ref,
                     w2_ref, b2_ref,
                     w3_ref, b3_ref,
                     w4_ref, b4_ref,
                     o_ref):
    # x arrives as f32; cast to bf16 in-kernel so all matmuls are bf16 x bf16 -> f32
    # (MXU native).  Bias add / leaky-relu / tanh stay in f32 (VPU/EUP, free filler).
    h = x_ref[...].astype(jnp.bfloat16)

    h = jnp.dot(h, w1_ref[...], preferred_element_type=jnp.float32) + b1_ref[...]
    h = _leaky_relu(h).astype(jnp.bfloat16)

    h = jnp.dot(h, w2_ref[...], preferred_element_type=jnp.float32) + b2_ref[...]
    h = _leaky_relu(h).astype(jnp.bfloat16)

    h = jnp.dot(h, w3_ref[...], preferred_element_type=jnp.float32) + b3_ref[...]
    h = _leaky_relu(h).astype(jnp.bfloat16)

    h = jnp.dot(h, w4_ref[...], preferred_element_type=jnp.float32) + b4_ref[...]
    o_ref[...] = jnp.tanh(h).astype(o_ref.dtype)


def prepare_params(params_f32):
    """Cast weights to bf16 (matmul inputs); keep biases f32 (bias add is in f32)."""
    prepped = {}
    for i in range(1, 5):
        prepped[f"w{i}"] = params_f32[f"w{i}"].astype(jnp.bfloat16)
        prepped[f"b{i}"] = params_f32[f"b{i}"].astype(jnp.float32)
    return prepped


@functools.partial(jax.jit, static_argnames=("batch_tile",))
def generator_forward(x, params, *, batch_tile=512):
    """x: [B, latent_dim] f32. params: output of prepare_params. Returns [B, 784] f32."""
    B = x.shape[0]
    # Cap the tile so the (parallel) batch grid has >= 2 steps whenever possible
    # (keeps both v7x TensorCores busy); round to the sublane multiple (8).
    half_tile = _round_up(pl.cdiv(B, 2), 8)
    tb = min(batch_tile, half_tile)
    Bp = _round_up(B, tb)
    if Bp != B:
        x = jnp.pad(x, ((0, Bp - B), (0, 0)))   # zero rows; sliced off below

    w1, b1 = params["w1"], params["b1"]
    w2, b2 = params["w2"], params["b2"]
    w3, b3 = params["w3"], params["b3"]
    w4, b4 = params["w4"], params["b4"]

    # Constant-index (grid-resident) blocks: single-buffer to halve weight VMEM.
    def resident(arr):
        return pl.BlockSpec(arr.shape, lambda i: (0,) * arr.ndim,
                            pipeline_mode=pl.Buffered(1))

    matmul_flops = 2 * Bp * sum(fi * fo for fi, fo in _LAYER_DIMS)
    elementwise_flops = 3 * Bp * (H1 + H2 + H3) + Bp * IMG_DIM   # bias + leaky-relu + bias
    weight_bytes = sum(fi * fo for fi, fo in _LAYER_DIMS) * 2 \
        + sum(fo for _, fo in _LAYER_DIMS) * 4
    cost = pl.CostEstimate(
        flops=matmul_flops + elementwise_flops,
        transcendentals=Bp * IMG_DIM,                     # tanh
        bytes_accessed=Bp * LATENT_DIM * 4 + weight_bytes + Bp * IMG_DIM * 4,
    )

    out = pl.pallas_call(
        generator_kernel,
        out_shape=jax.ShapeDtypeStruct((Bp, IMG_DIM), jnp.float32),
        grid_spec=pl.GridSpec(
            grid=(Bp // tb,),
            in_specs=[
                pl.BlockSpec((tb, LATENT_DIM), lambda i: (i, 0)),   # x batch tile (f32)
                resident(w1), resident(b1),
                resident(w2), resident(b2),
                resident(w3), resident(b3),
                resident(w4), resident(b4),
            ],
            # 784 == full last dim -> legal block; only the last lane-group is masked.
            out_specs=pl.BlockSpec((tb, IMG_DIM), lambda i: (i, 0)),
        ),
        compiler_params=pltpu.CompilerParams(
            dimension_semantics=("parallel",),   # batch tiles shard across TCs on v7x
            vmem_limit_bytes=(64 << 20) if tb > 512 else None,
        ),
        cost_estimate=cost,
    )(x, w1, b1, w2, b2, w3, b3, w4, b4)

    return out if Bp == B else out[:B]


def init_params(key):
    """Deterministic init matching PyTorch nn.Linear defaults:
    U(-1/sqrt(fan_in), 1/sqrt(fan_in)) for both weight and bias. Kept in f32."""
    params = {}
    keys = jax.random.split(key, 2 * len(_LAYER_DIMS))
    for idx, (fan_in, fan_out) in enumerate(_LAYER_DIMS):
        bound = 1.0 / jnp.sqrt(float(fan_in))
        w = jax.random.uniform(keys[2 * idx], (fan_in, fan_out),
                               minval=-bound, maxval=bound, dtype=jnp.float32)
        b = jax.random.uniform(keys[2 * idx + 1], (1, fan_out),
                               minval=-bound, maxval=bound, dtype=jnp.float32)
        params[f"w{idx + 1}"] = w
        params[f"b{idx + 1}"] = b
    return params


def reference_forward(x, params):
    """Pure-f32 reference (matches the PyTorch module semantics exactly)."""
    h = x
    for i in range(1, 4):
        h = h @ params[f"w{i}"] + params[f"b{i}"]
        h = jnp.where(h >= 0, h, NEG_SLOPE * h)
    h = h @ params["w4"] + params["b4"]
    return jnp.tanh(h)


def reference_forward_bf16(x, params):
    """Reference mimicking the kernel's precision (bf16 matmul inputs, f32 accumulation)."""
    h = x.astype(jnp.bfloat16)
    for i in range(1, 4):
        h = jnp.dot(h, params[f"w{i}"].astype(jnp.bfloat16),
                    preferred_element_type=jnp.float32) + params[f"b{i}"]
        h = jnp.where(h >= 0, h, NEG_SLOPE * h).astype(jnp.bfloat16)
    h = jnp.dot(h, params["w4"].astype(jnp.bfloat16),
                preferred_element_type=jnp.float32) + params["b4"]
    return jnp.tanh(h)


if __name__ == "__main__":
    key = jax.random.PRNGKey(0)
    pkey, xkey, xkey2 = jax.random.split(key, 3)
    params_f32 = init_params(pkey)
    gparams = prepare_params(params_f32)

    # Small batch (single grid step, tile rounded to the sublane multiple).
    B = 8
    x = jax.random.normal(xkey, (B, LATENT_DIM), dtype=jnp.float32)
    out = jax.block_until_ready(generator_forward(x, gparams))
    assert out.shape == (B, IMG_DIM), out.shape
    assert jnp.allclose(out, reference_forward_bf16(x, params_f32), atol=2e-3, rtol=2e-3), \
        "mismatch vs matched-precision reference"
    assert jnp.allclose(out, reference_forward(x, params_f32), atol=3e-2, rtol=3e-2), \
        "mismatch vs f32 reference"

    # Ragged batch exercising zero-pad + multi-tile (grid >= 2, parallel across cores) path.
    B2 = 200
    x2 = jax.random.normal(xkey2, (B2, LATENT_DIM), dtype=jnp.float32)
    out2 = jax.block_until_ready(generator_forward(x2, gparams))
    assert out2.shape == (B2, IMG_DIM), out2.shape
    assert jnp.allclose(out2, reference_forward_bf16(x2, params_f32), atol=2e-3, rtol=2e-3), \
        "mismatch vs matched-precision reference (tiled path)"

    print("KERNEL_OK")
</pallas_src>

<mosaic_0001>
module attributes {stable_mosaic.version = 11 : i64} {
  func.func @generator_kernel(%arg0: i32, %arg1: memref<8x64xf32, #tpu.memory_space<vmem>>, %arg2: memref<64x128xbf16, #tpu.memory_space<vmem>>, %arg3: memref<1x128xf32, #tpu.memory_space<vmem>>, %arg4: memref<128x256xbf16, #tpu.memory_space<vmem>>, %arg5: memref<1x256xf32, #tpu.memory_space<vmem>>, %arg6: memref<256x512xbf16, #tpu.memory_space<vmem>>, %arg7: memref<1x512xf32, #tpu.memory_space<vmem>>, %arg8: memref<512x784xbf16, #tpu.memory_space<vmem>>, %arg9: memref<1x784xf32, #tpu.memory_space<vmem>>, %arg10: memref<8x784xf32, #tpu.memory_space<vmem>>) attributes {dimension_semantics = [#tpu.dimension_semantics<parallel>], iteration_bounds = array<i64: 1>, scalar_prefetch = 0 : i64, scratch_operands = 0 : i64, tpu.core_type = #tpu.core_type<tc>, window_params = [{transform_indices = @transform_0, window_bounds = array<i64: 8, 64>}, {pipeline_mode = #tpu.pipeline_mode<synchronous>, transform_indices = @transform_1, window_bounds = array<i64: 64, 128>}, {pipeline_mode = #tpu.pipeline_mode<synchronous>, transform_indices = @transform_2, window_bounds = array<i64: 1, 128>}, {pipeline_mode = #tpu.pipeline_mode<synchronous>, transform_indices = @transform_3, window_bounds = array<i64: 128, 256>}, {pipeline_mode = #tpu.pipeline_mode<synchronous>, transform_indices = @transform_4, window_bounds = array<i64: 1, 256>}, {pipeline_mode = #tpu.pipeline_mode<synchronous>, transform_indices = @transform_5, window_bounds = array<i64: 256, 512>}, {pipeline_mode = #tpu.pipeline_mode<synchronous>, transform_indices = @transform_6, window_bounds = array<i64: 1, 512>}, {pipeline_mode = #tpu.pipeline_mode<synchronous>, transform_indices = @transform_7, window_bounds = array<i64: 512, 784>}, {pipeline_mode = #tpu.pipeline_mode<synchronous>, transform_indices = @transform_8, window_bounds = array<i64: 1, 784>}, {transform_indices = @transform_9, window_bounds = array<i64: 8, 784>}]} {
    %c0 = arith.constant 0 : index
    %c0_0 = arith.constant 0 : index
    %0 = vector.load %arg1[%c0, %c0_0] : memref<8x64xf32, #tpu.memory_space<vmem>>, vector<8x64xf32>
    %1 = arith.truncf %0 : vector<8x64xf32> to vector<8x64xbf16>
    %c0_1 = arith.constant 0 : index
    %c0_2 = arith.constant 0 : index
    %2 = vector.load %arg2[%c0_1, %c0_2] : memref<64x128xbf16, #tpu.memory_space<vmem>>, vector<64x128xbf16>
    %cst = arith.constant dense<0.000000e+00> : vector<8x128xf32>
    %3 = tpu.matmul %1, %2, %cst {dimension_numbers = #tpu.dot_dimension_numbers<[1], [0], [0], [1], [0, 0, 1, 1], [], []>} : vector<8x64xbf16>, vector<64x128xbf16>, vector<8x128xf32> -> vector<8x128xf32>
    %c0_3 = arith.constant 0 : index
    %c0_4 = arith.constant 0 : index
    %4 = vector.load %arg3[%c0_3, %c0_4] : memref<1x128xf32, #tpu.memory_space<vmem>>, vector<1x128xf32>
    %5 = vector.broadcast %4 : vector<1x128xf32> to vector<8x128xf32>
    %6 = arith.addf %3, %5 : vector<8x128xf32>
    %cst_5 = arith.constant 0.000000e+00 : f32
    %7 = vector.broadcast %cst_5 : f32 to vector<8x128xf32>
    %8 = arith.cmpf oge, %6, %7 : vector<8x128xf32>
    %cst_6 = arith.constant 1.000000e-01 : f32
    %9 = vector.broadcast %cst_6 : f32 to vector<8x128xf32>
    %10 = arith.mulf %9, %6 : vector<8x128xf32>
    %11 = arith.select %8, %6, %10 : vector<8x128xi1>, vector<8x128xf32>
    %12 = arith.truncf %11 : vector<8x128xf32> to vector<8x128xbf16>
    %c0_7 = arith.constant 0 : index
    %c0_8 = arith.constant 0 : index
    %13 = vector.load %arg4[%c0_7, %c0_8] : memref<128x256xbf16, #tpu.memory_space<vmem>>, vector<128x256xbf16>
    %cst_9 = arith.constant dense<0.000000e+00> : vector<8x256xf32>
    %14 = tpu.matmul %12, %13, %cst_9 {dimension_numbers = #tpu.dot_dimension_numbers<[1], [0], [0], [1], [0, 0, 1, 1], [], []>} : vector<8x128xbf16>, vector<128x256xbf16>, vector<8x256xf32> -> vector<8x256xf32>
    %c0_10 = arith.constant 0 : index
    %c0_11 = arith.constant 0 : index
    %15 = vector.load %arg5[%c0_10, %c0_11] : memref<1x256xf32, #tpu.memory_space<vmem>>, vector<1x256xf32>
    %16 = vector.broadcast %15 : vector<1x256xf32> to vector<8x256xf32>
    %17 = arith.addf %14, %16 : vector<8x256xf32>
    %cst_12 = arith.constant 0.000000e+00 : f32
    %18 = vector.broadcast %cst_12 : f32 to vector<8x256xf32>
    %19 = arith.cmpf oge, %17, %18 : vector<8x256xf32>
    %cst_13 = arith.constant 1.000000e-01 : f32
    %20 = vector.broadcast %cst_13 : f32 to vector<8x256xf32>
    %21 = arith.mulf %20, %17 : vector<8x256xf32>
    %22 = arith.select %19, %17, %21 : vector<8x256xi1>, vector<8x256xf32>
    %23 = arith.truncf %22 : vector<8x256xf32> to vector<8x256xbf16>
    %c0_14 = arith.constant 0 : index
    %c0_15 = arith.constant 0 : index
    %24 = vector.load %arg6[%c0_14, %c0_15] : memref<256x512xbf16, #tpu.memory_space<vmem>>, vector<256x512xbf16>
    %cst_16 = arith.constant dense<0.000000e+00> : vector<8x512xf32>
    %25 = tpu.matmul %23, %24, %cst_16 {dimension_numbers = #tpu.dot_dimension_numbers<[1], [0], [0], [1], [0, 0, 1, 1], [], []>} : vector<8x256xbf16>, vector<256x512xbf16>, vector<8x512xf32> -> vector<8x512xf32>
    %c0_17 = arith.constant 0 : index
    %c0_18 = arith.constant 0 : index
    %26 = vector.load %arg7[%c0_17, %c0_18] : memref<1x512xf32, #tpu.memory_space<vmem>>, vector<1x512xf32>
    %27 = vector.broadcast %26 : vector<1x512xf32> to vector<8x512xf32>
    %28 = arith.addf %25, %27 : vector<8x512xf32>
    %cst_19 = arith.constant 0.000000e+00 : f32
    %29 = vector.broadcast %cst_19 : f32 to vector<8x512xf32>
    %30 = arith.cmpf oge, %28, %29 : vector<8x512xf32>
    %cst_20 = arith.constant 1.000000e-01 : f32
    %31 = vector.broadcast %cst_20 : f32 to vector<8x512xf32>
    %32 = arith.mulf %31, %28 : vector<8x512xf32>
    %33 = arith.select %30, %28, %32 : vector<8x512xi1>, vector<8x512xf32>
    %34 = arith.truncf %33 : vector<8x512xf32> to vector<8x512xbf16>
    %c0_21 = arith.constant 0 : index
    %c0_22 = arith.constant 0 : index
    %35 = vector.load %arg8[%c0_21, %c0_22] : memref<512x784xbf16, #tpu.memory_space<vmem>>, vector<512x784xbf16>
    %cst_23 = arith.constant dense<0.000000e+00> : vector<8x784xf32>
    %36 = tpu.matmul %34, %35, %cst_23 {dimension_numbers = #tpu.dot_dimension_numbers<[1], [0], [0], [1], [0, 0, 1, 1], [], []>} : vector<8x512xbf16>, vector<512x784xbf16>, vector<8x784xf32> -> vector<8x784xf32>
    %c0_24 = arith.constant 0 : index
    %c0_25 = arith.constant 0 : index
    %37 = vector.load %arg9[%c0_24, %c0_25] : memref<1x784xf32, #tpu.memory_space<vmem>>, vector<1x784xf32>
    %38 = vector.broadcast %37 : vector<1x784xf32> to vector<8x784xf32>
    %39 = arith.addf %36, %38 : vector<8x784xf32>
    %40 = math.tanh %39 : vector<8x784xf32>
    %c0_26 = arith.constant 0 : index
    %c0_27 = arith.constant 0 : index
    %41 = vector.load %arg10[%c0_26, %c0_27] : memref<8x784xf32, #tpu.memory_space<vmem>>, vector<8x784xf32>
    tpu.vector_store %arg10[%c0_26, %c0_27], %40 {strides = array<i32>} : memref<8x784xf32, #tpu.memory_space<vmem>>, vector<8x784xf32>,
    return
  }
  func.func @transform_0(%arg0: i32) -> (i32, i32) {
    %c0_i32 = arith.constant 0 : i32
    %c0_i32_0 = arith.constant 0 : i32
    return %arg0, %c0_i32 : i32, i32
  }
  func.func @transform_1(%arg0: i32) -> (i32, i32) {
    %c0_i32 = arith.constant 0 : i32
    %c0_i32_0 = arith.constant 0 : i32
    %c0_i32_1 = arith.constant 0 : i32
    return %c0_i32, %c0_i32_0 : i32, i32
  }
  func.func @transform_2(%arg0: i32) -> (i32, i32) {
    %c0_i32 = arith.constant 0 : i32
    %c0_i32_0 = arith.constant 0 : i32
    %c0_i32_1 = arith.constant 0 : i32
    return %c0_i32, %c0_i32_0 : i32, i32
  }
  func.func @transform_3(%arg0: i32) -> (i32, i32) {
    %c0_i32 = arith.constant 0 : i32
    %c0_i32_0 = arith.constant 0 : i32
    %c0_i32_1 = arith.constant 0 : i32
    return %c0_i32, %c0_i32_0 : i32, i32
  }
  func.func @transform_4(%arg0: i32) -> (i32, i32) {
    %c0_i32 = arith.constant 0 : i32
    %c0_i32_0 = arith.constant 0 : i32
    %c0_i32_1 = arith.constant 0 : i32
    return %c0_i32, %c0_i32_0 : i32, i32
  }
  func.func @transform_5(%arg0: i32) -> (i32, i32) {
    %c0_i32 = arith.constant 0 : i32
    %c0_i32_0 = arith.constant 0 : i32
    %c0_i32_1 = arith.constant 0 : i32
    return %c0_i32, %c0_i32_0 : i32, i32
  }
  func.func @transform_6(%arg0: i32) -> (i32, i32) {
    %c0_i32 = arith.constant 0 : i32
    %c0_i32_0 = arith.constant 0 : i32
    %c0_i32_1 = arith.constant 0 : i32
    return %c0_i32, %c0_i32_0 : i32, i32
  }
  func.func @transform_7(%arg0: i32) -> (i32, i32) {
    %c0_i32 = arith.constant 0 : i32
    %c0_i32_0 = arith.constant 0 : i32
    %c0_i32_1 = arith.constant 0 : i32
    return %c0_i32, %c0_i32_0 : i32, i32
  }
  func.func @transform_8(%arg0: i32) -> (i32, i32) {
    %c0_i32 = arith.constant 0 : i32
    %c0_i32_0 = arith.constant 0 : i32
    %c0_i32_1 = arith.constant 0 : i32
    return %c0_i32, %c0_i32_0 : i32, i32
  }
  func.func @transform_9(%arg0: i32) -> (i32, i32) {
    %c0_i32 = arith.constant 0 : i32
    %c0_i32_0 = arith.constant 0 : i32
    return %arg0, %c0_i32 : i32, i32
  }
}

</mosaic_0001>

<llo_original>
// kernel: generator_forward.1
$region0: #{generator_forward.1}
  #allocation0 [shape = 'u32[]', space=smem, size = 0x4, offset = 0x4, fixed_abs, tag = 'smem constant byte address 0x4 - core index']
  #allocation1 [shape = 'u32[72,128]{1,0:T(1,128)}', space=vmem, size = 0x9000, scoped, tag = 'internal scratch']
  %s0 = inlined_call_operand.vmem [shape: f32[8,64], index: 0, kind: input, shape index: {}]
  %s1 = inlined_call_operand.vmem [shape: bf16[64,128], index: 1, kind: input, shape index: {}]
  %s2 = inlined_call_operand.vmem [shape: f32[1,128], index: 2, kind: input, shape index: {}]
  %s3 = inlined_call_operand.vmem [shape: bf16[128,256], index: 3, kind: input, shape index: {}]
  %s4 = inlined_call_operand.vmem [shape: f32[1,256], index: 4, kind: input, shape index: {}]
  %s5 = inlined_call_operand.vmem [shape: bf16[256,512], index: 5, kind: input, shape index: {}]
  %s6 = inlined_call_operand.vmem [shape: f32[1,512], index: 6, kind: input, shape index: {}]
  %s7 = inlined_call_operand.vmem [shape: bf16[512,784], index: 7, kind: input, shape index: {}]
  %s8 = inlined_call_operand.vmem [shape: f32[1,784], index: 8, kind: input, shape index: {}]
  %s9 = inlined_call_operand.hbm [shape: f32[8,784], index: 9, kind: output, shape index: {}]
  %s10 = sld [smem:[#allocation0]]
  $region46: #{generator_forward.1} parent=0
    _
  %s12 = ssub.s32 1, %s10
  %s13 = scalar_select 0, %s12, %s10
  $region1: #{generator_forward.1} parent=0
    #allocation2 [shape = 'u8[28672]{0}', space=vmem, size = 0x7000, scoped, tag = 'output window, operand 0, single buffered']
    #allocation3 [shape = 's32[1]{0}', space=sflag, size = 0x4, scoped, tag = 'scoped memory for generator_forward.1']
    %14 = vsyncpa [#allocation3], 0
    // Predicated region
    $region2: #{generator_forward.1} parent=1 // pred_check
      _
    $region3: #{generator_forward.1} parent=1 // pred_check_branch
      %16 = sbr.rel (0) target = $region5
    $region4: #{generator_forward.1} parent=1 // pred_region
      _
    $region5: #{generator_forward.1} parent=1 // pred_fallthru
      _
    // Predicated region
    $region6: #{generator_forward.1} parent=1 // pred_check
      _
    $region7: #{generator_forward.1} parent=1 // pred_check_branch
      %18 = sbr.rel (0) target = $region9
    $region8: #{generator_forward.1} parent=1 // pred_region
      _
    $region9: #{generator_forward.1} parent=1 // pred_fallthru
      _
    // Predicated region
    $region10: #{generator_forward.1} parent=1 // pred_check
      _
    $region11: #{generator_forward.1} parent=1 // pred_check_branch
      %20 = sbr.rel (0) target = $region13
    $region12: #{generator_forward.1} parent=1 // pred_region
      _
    $region13: #{generator_forward.1} parent=1 // pred_fallthru
      _
    // Predicated region
    $region14: #{generator_forward.1} parent=1 // pred_check
      _
    $region15: #{generator_forward.1} parent=1 // pred_check_branch
      %22 = sbr.rel (0) target = $region17
    $region16: #{generator_forward.1} parent=1 // pred_region
      _
    $region17: #{generator_forward.1} parent=1 // pred_fallthru
      _
    // Predicated region
    $region18: #{generator_forward.1} parent=1 // pred_check
      _
    $region19: #{generator_forward.1} parent=1 // pred_check_branch
      %24 = sbr.rel (0) target = $region21
    $region20: #{generator_forward.1} parent=1 // pred_region
      _
    $region21: #{generator_forward.1} parent=1 // pred_fallthru
      _
    // Predicated region
    $region22: #{generator_forward.1} parent=1 // pred_check
      _
    $region23: #{generator_forward.1} parent=1 // pred_check_branch
      %26 = sbr.rel (0) target = $region25
    $region24: #{generator_forward.1} parent=1 // pred_region
      _
    $region25: #{generator_forward.1} parent=1 // pred_fallthru
      _
    // Predicated region
    $region26: #{generator_forward.1} parent=1 // pred_check
      _
    $region27: #{generator_forward.1} parent=1 // pred_check_branch
      %28 = sbr.rel (0) target = $region29
    $region28: #{generator_forward.1} parent=1 // pred_region
      _
    $region29: #{generator_forward.1} parent=1 // pred_fallthru
      _
    // Predicated region
    $region30: #{generator_forward.1} parent=1 // pred_check
      _
    $region31: #{generator_forward.1} parent=1 // pred_check_branch
      %30 = sbr.rel (0) target = $region33
    $region32: #{generator_forward.1} parent=1 // pred_region
      _
    $region33: #{generator_forward.1} parent=1 // pred_fallthru
      _
    // Predicated region
    $region34: #{generator_forward.1} parent=1 // pred_check
      _
    $region35: #{generator_forward.1} parent=1 // pred_check_branch
      %32 = sbr.rel (0) target = $region37
    $region36: #{generator_forward.1} parent=1 // pred_region
      _
    $region37: #{generator_forward.1} parent=1 // pred_fallthru
      _
    %v34 = vld [vmem:[%s0] sm:$0xff]
    %v35 = vpack.c.bf16 %v34, %v34
    %v36 = vld [vmem:[%s1] sm:$0xf]
    %v37 = vld [vmem:[%s1 + $0x4] sm:$0xf]
    %v38 = vld [vmem:[%s1 + $0x8] sm:$0xf]
    %v39 = vld [vmem:[%s1 + $0xc] sm:$0xf]
    %v40 = vld [vmem:[%s1 + $0x10] sm:$0xf]
    %v41 = vld [vmem:[%s1 + $0x14] sm:$0xf]
    %v42 = vld [vmem:[%s1 + $0x18] sm:$0xf]
    %v43 = vld [vmem:[%s1 + $0x1c] sm:$0xf]
    %v44 = vld [vmem:[%s2] sm:$0x1]
    %v46 = vperm.slane %v44, 0
    %v56 = vunpack.c.l.b16 %v36
    %v57 = vunpack.c.l.b16 %v37
    %v58 = vunpack.c.l.b16 %v38
    %v59 = vunpack.c.l.b16 %v39
    %v60 = vunpack.c.l.b16 %v40
    %v61 = vunpack.c.l.b16 %v41
    %v62 = vunpack.c.l.b16 %v42
    %v63 = vunpack.c.l.b16 %v43
    %v64 = vpack.c.b16 %v57, %v56
    %v65 = vpack.c.b16 %v59, %v58
    %v66 = vpack.c.b16 %v61, %v60
    %v67 = vpack.c.b16 %v63, %v62
    %vm72 = vcmask 523264
    %v74 = vsel %vm72, %v35, 0
    %76 = vmatpush.bf16.msra.mxu0 0
    %77 = vmatpush.bf16.msra.mxu0 0
    %78 = vmatpush.bf16.msra.mxu0 0
    %79 = vmatpush.bf16.msra.mxu0 0
    %80 = vmatpush.bf16.msra.mxu0 %v67
    %81 = vmatpush.bf16.msra.mxu0 %v66
    %82 = vmatpush.bf16.msra.mxu0 %v65
    %83 = vmatpush.bf16.msra.mxu0 %v64
    %84 = vmatmul.bf16.gmra.mxu0 %v74
    %v85 = vpop.f32.mrf.mxu0
    %v86 = vadd.f32 %v46, %v85
    %v87 = vpop.f32.mrf.mxu0
    %88 = vdwg.mxu0
    %vm89 = vcmp.ge.f32.partialorder %v86, 0.0
    %v90 = vmul.f32 %v86, 0.1
    %v91 = vsel %vm89, %v86, %v90
    %v92 = vpack.c.bf16 %v91, %v91
    %v93 = vld [vmem:[%s3] sm:$0xff]
    %v94 = vld [vmem:[%s3 + $0x8] sm:$0xff]
    %v95 = vld [vmem:[%s3 + $0x10] sm:$0xff]
    %v96 = vld [vmem:[%s3 + $0x18] sm:$0xff]
    %v97 = vld [vmem:[%s3 + $0x20] sm:$0xff]
    %v98 = vld [vmem:[%s3 + $0x28] sm:$0xff]
    %v99 = vld [vmem:[%s3 + $0x30] sm:$0xff]
    %v100 = vld [vmem:[%s3 + $0x38] sm:$0xff]
    %v101 = vld [vmem:[%s3 + $0x40] sm:$0xff]
    %v102 = vld [vmem:[%s3 + $0x48] sm:$0xff]
    %v103 = vld [vmem:[%s3 + $0x50] sm:$0xff]
    %v104 = vld [vmem:[%s3 + $0x58] sm:$0xff]
    %v105 = vld [vmem:[%s3 + $0x60] sm:$0xff]
    %v106 = vld [vmem:[%s3 + $0x68] sm:$0xff]
    %v107 = vld [vmem:[%s3 + $0x70] sm:$0xff]
    %v108 = vld [vmem:[%s3 + $0x78] sm:$0xff]
    %v109 = vld [vmem:[%s4] sm:$0x3]
    %v111 = vperm.slane %v109, 0
    %v112 = vperm.slane %v109, 1
    %v131 = vunpack.c.l.b16 %v93
    %v132 = vunpack.c.h.b16 %v93
    %v133 = vunpack.c.l.b16 %v94
    %v134 = vunpack.c.h.b16 %v94
    %v135 = vunpack.c.l.b16 %v95
    %v136 = vunpack.c.h.b16 %v95
    %v137 = vunpack.c.l.b16 %v96
    %v138 = vunpack.c.h.b16 %v96
    %v139 = vunpack.c.l.b16 %v97
    %v140 = vunpack.c.h.b16 %v97
    %v141 = vunpack.c.l.b16 %v98
    %v142 = vunpack.c.h.b16 %v98
    %v143 = vunpack.c.l.b16 %v99
    %v144 = vunpack.c.h.b16 %v99
    %v145 = vunpack.c.l.b16 %v100
    %v146 = vunpack.c.h.b16 %v100
    %v147 = vunpack.c.l.b16 %v101
    %v148 = vunpack.c.h.b16 %v101
    %v149 = vunpack.c.l.b16 %v102
    %v150 = vunpack.c.h.b16 %v102
    %v151 = vunpack.c.l.b16 %v103
    %v152 = vunpack.c.h.b16 %v103
    %v153 = vunpack.c.l.b16 %v104
    %v154 = vunpack.c.h.b16 %v104
    %v155 = vunpack.c.l.b16 %v105
    %v156 = vunpack.c.h.b16 %v105
    %v157 = vunpack.c.l.b16 %v106
    %v158 = vunpack.c.h.b16 %v106
    %v159 = vunpack.c.l.b16 %v107
    %v160 = vunpack.c.h.b16 %v107
    %v161 = vunpack.c.l.b16 %v108
    %v162 = vunpack.c.h.b16 %v108
    %v163 = vpack.c.b16 %v133, %v131
    %v164 = vpack.c.b16 %v134, %v132
    %v165 = vpack.c.b16 %v137, %v135
    %v166 = vpack.c.b16 %v138, %v136
    %v167 = vpack.c.b16 %v141, %v139
    %v168 = vpack.c.b16 %v142, %v140
    %v169 = vpack.c.b16 %v145, %v143
    %v170 = vpack.c.b16 %v146, %v144
    %v171 = vpack.c.b16 %v149, %v147
    %v172 = vpack.c.b16 %v150, %v148
    %v173 = vpack.c.b16 %v153, %v151
    %v174 = vpack.c.b16 %v154, %v152
    %v175 = vpack.c.b16 %v157, %v155
    %v176 = vpack.c.b16 %v158, %v156
    %v177 = vpack.c.b16 %v161, %v159
    %v178 = vpack.c.b16 %v162, %v160
    %195 = vmatpush.bf16.msra.mxu0 %v177
    %196 = vmatpush.bf16.msra.mxu0 %v175
    %197 = vmatpush.bf16.msra.mxu0 %v173
    %198 = vmatpush.bf16.msra.mxu0 %v171
    %199 = vmatpush.bf16.msra.mxu0 %v169
    %200 = vmatpush.bf16.msra.mxu0 %v167
    %201 = vmatpush.bf16.msra.mxu0 %v165
    %202 = vmatpush.bf16.msra.mxu0 %v163
    %203 = vmatmul.bf16.gmra.mxu0 %v92
    %v204 = vpop.f32.mrf.mxu0
    %v205 = vadd.f32 %v111, %v204
    %v206 = vpop.f32.mrf.mxu0
    %207 = vdwg.mxu0
    %208 = vmatpush.bf16.msra.mxu0 %v178
    %209 = vmatpush.bf16.msra.mxu0 %v176
    %210 = vmatpush.bf16.msra.mxu0 %v174
    %211 = vmatpush.bf16.msra.mxu0 %v172
    %212 = vmatpush.bf16.msra.mxu0 %v170
    %213 = vmatpush.bf16.msra.mxu0 %v168
    %214 = vmatpush.bf16.msra.mxu0 %v166
    %215 = vmatpush.bf16.msra.mxu0 %v164
    %216 = vmatmul.bf16.gmra.mxu0 %v92
    %v217 = vpop.f32.mrf.mxu0
    %v218 = vadd.f32 %v112, %v217
    %v219 = vpop.f32.mrf.mxu0
    %220 = vdwg.mxu0
    %vm221 = vcmp.ge.f32.partialorder %v205, 0.0
    %vm222 = vcmp.ge.f32.partialorder %v218, 0.0
    %v223 = vmul.f32 %v205, 0.1
    %v224 = vmul.f32 %v218, 0.1
    %v225 = vsel %vm221, %v205, %v223
    %v226 = vsel %vm222, %v218, %v224
    %v227 = vpack.c.bf16 %v225, %v225
    %v228 = vpack.c.bf16 %v226, %v226
    %v229 = vld [vmem:[%s5] sm:$0xff]
    %v230 = vld [vmem:[%s5 + $0x8] sm:$0xff]
    %v231 = vld [vmem:[%s5 + $0x10] sm:$0xff]
    %v232 = vld [vmem:[%s5 + $0x18] sm:$0xff]
    %v233 = vld [vmem:[%s5 + $0x20] sm:$0xff]
    %v234 = vld [vmem:[%s5 + $0x28] sm:$0xff]
    %v235 = vld [vmem:[%s5 + $0x30] sm:$0xff]
    %v236 = vld [vmem:[%s5 + $0x38] sm:$0xff]
    %v237 = vld [vmem:[%s5 + $0x40] sm:$0xff]
    %v238 = vld [vmem:[%s5 + $0x48] sm:$0xff]
    %v239 = vld [vmem:[%s5 + $0x50] sm:$0xff]
    %v240 = vld [vmem:[%s5 + $0x58] sm:$0xff]
    %v241 = vld [vmem:[%s5 + $0x60] sm:$0xff]
    %v242 = vld [vmem:[%s5 + $0x68] sm:$0xff]
    %v243 = vld [vmem:[%s5 + $0x70] sm:$0xff]
    %v244 = vld [vmem:[%s5 + $0x78] sm:$0xff]
    %v245 = vld [vmem:[%s5 + $0x80] sm:$0xff]
    %v246 = vld [vmem:[%s5 + $0x88] sm:$0xff]
    %v247 = vld [vmem:[%s5 + $0x90] sm:$0xff]
    %v248 = vld [vmem:[%s5 + $0x98] sm:$0xff]
    %v249 = vld [vmem:[%s5 + $0xa0] sm:$0xff]
    %v250 = vld [vmem:[%s5 + $0xa8] sm:$0xff]
    %v251 = vld [vmem:[%s5 + $0xb0] sm:$0xff]
    %v252 = vld [vmem:[%s5 + $0xb8] sm:$0xff]
    %v253 = vld [vmem:[%s5 + $0xc0] sm:$0xff]
    %v254 = vld [vmem:[%s5 + $0xc8] sm:$0xff]
    %v255 = vld [vmem:[%s5 + $0xd0] sm:$0xff]
    %v256 = vld [vmem:[%s5 + $0xd8] sm:$0xff]
    %v257 = vld [vmem:[%s5 + $0xe0] sm:$0xff]
    %v258 = vld [vmem:[%s5 + $0xe8] sm:$0xff]
    %v259 = vld [vmem:[%s5 + $0xf0] sm:$0xff]
    %v260 = vld [vmem:[%s5 + $0xf8] sm:$0xff]
    %v261 = vld [vmem:[%s5 + $0x100] sm:$0xff]
    %v262 = vld [vmem:[%s5 + $0x108] sm:$0xff]
    %v263 = vld [vmem:[%s5 + $0x110] sm:$0xff]
    %v264 = vld [vmem:[%s5 + $0x118] sm:$0xff]
    %v265 = vld [vmem:[%s5 + $0x120] sm:$0xff]
    %v266 = vld [vmem:[%s5 + $0x128] sm:$0xff]
    %v267 = vld [vmem:[%s5 + $0x130] sm:$0xff]
    %v268 = vld [vmem:[%s5 + $0x138] sm:$0xff]
    %v269 = vld [vmem:[%s5 + $0x140] sm:$0xff]
    %v270 = vld [vmem:[%s5 + $0x148] sm:$0xff]
    %v271 = vld [vmem:[%s5 + $0x150] sm:$0xff]
    %v272 = vld [vmem:[%s5 + $0x158] sm:$0xff]
    %v273 = vld [vmem:[%s5 + $0x160] sm:$0xff]
    %v274 = vld [vmem:[%s5 + $0x168] sm:$0xff]
    %v275 = vld [vmem:[%s5 + $0x170] sm:$0xff]
    %v276 = vld [vmem:[%s5 + $0x178] sm:$0xff]
    %v277 = vld [vmem:[%s5 + $0x180] sm:$0xff]
    %v278 = vld [vmem:[%s5 + $0x188] sm:$0xff]
    %v279 = vld [vmem:[%s5 + $0x190] sm:$0xff]
    %v280 = vld [vmem:[%s5 + $0x198] sm:$0xff]
    %v281 = vld [vmem:[%s5 + $0x1a0] sm:$0xff]
    %v282 = vld [vmem:[%s5 + $0x1a8] sm:$0xff]
    %v283 = vld [vmem:[%s5 + $0x1b0] sm:$0xff]
    %v284 = vld [vmem:[%s5 + $0x1b8] sm:$0xff]
    %v285 = vld [vmem:[%s5 + $0x1c0] sm:$0xff]
    %v286 = vld [vmem:[%s5 + $0x1c8] sm:$0xff]
    %v287 = vld [vmem:[%s5 + $0x1d0] sm:$0xff]
    %v288 = vld [vmem:[%s5 + $0x1d8] sm:$0xff]
    %v289 = vld [vmem:[%s5 + $0x1e0] sm:$0xff]
    %v290 = vld [vmem:[%s5 + $0x1e8] sm:$0xff]
    %v291 = vld [vmem:[%s5 + $0x1f0] sm:$0xff]
    %v292 = vld [vmem:[%s5 + $0x1f8] sm:$0xff]
    %v293 = vld [vmem:[%s6] sm:$0xf]
    %v295 = vperm.slane %v293, 0
    %v296 = vperm.slane %v293, 1
    %v297 = vperm.slane %v293, 2
    %v298 = vperm.slane %v293, 3
    %v367 = vunpack.c.l.b16 %v229
    %v368 = vunpack.c.h.b16 %v229
    %v369 = vunpack.c.l.b16 %v230
    %v370 = vunpack.c.h.b16 %v230
    %v371 = vunpack.c.l.b16 %v231
    %v372 = vunpack.c.h.b16 %v231
    %v373 = vunpack.c.l.b16 %v232
    %v374 = vunpack.c.h.b16 %v232
    %v375 = vunpack.c.l.b16 %v233
    %v376 = vunpack.c.h.b16 %v233
    %v377 = vunpack.c.l.b16 %v234
    %v378 = vunpack.c.h.b16 %v234
    %v379 = vunpack.c.l.b16 %v235
    %v380 = vunpack.c.h.b16 %v235
    %v381 = vunpack.c.l.b16 %v236
    %v382 = vunpack.c.h.b16 %v236
    %v383 = vunpack.c.l.b16 %v237
    %v384 = vunpack.c.h.b16 %v237
    %v385 = vunpack.c.l.b16 %v238
    %v386 = vunpack.c.h.b16 %v238
    %v387 = vunpack.c.l.b16 %v239
    %v388 = vunpack.c.h.b16 %v239
    %v389 = vunpack.c.l.b16 %v240
    %v390 = vunpack.c.h.b16 %v240
    %v391 = vunpack.c.l.b16 %v241
    %v392 = vunpack.c.h.b16 %v241
    %v393 = vunpack.c.l.b16 %v242
    %v394 = vunpack.c.h.b16 %v242
    %v395 = vunpack.c.l.b16 %v243
    %v396 = vunpack.c.h.b16 %v243
    %v397 = vunpack.c.l.b16 %v244
    %v398 = vunpack.c.h.b16 %v244
    %v399 = vunpack.c.l.b16 %v245
    %v400 = vunpack.c.h.b16 %v245
    %v401 = vunpack.c.l.b16 %v246
    %v402 = vunpack.c.h.b16 %v246
    %v403 = vunpack.c.l.b16 %v247
    %v404 = vunpack.c.h.b16 %v247
    %v405 = vunpack.c.l.b16 %v248
    %v406 = vunpack.c.h.b16 %v248
    %v407 = vunpack.c.l.b16 %v249
    %v408 = vunpack.c.h.b16 %v249
    %v409 = vunpack.c.l.b16 %v250
    %v410 = vunpack.c.h.b16 %v250
    %v411 = vunpack.c.l.b16 %v251
    %v412 = vunpack.c.h.b16 %v251
    %v413 = vunpack.c.l.b16 %v252
    %v414 = vunpack.c.h.b16 %v252
    %v415 = vunpack.c.l.b16 %v253
    %v416 = vunpack.c.h.b16 %v253
    %v417 = vunpack.c.l.b16 %v254
    %v418 = vunpack.c.h.b16 %v254
    %v419 = vunpack.c.l.b16 %v255
    %v420 = vunpack.c.h.b16 %v255
    %v421 = vunpack.c.l.b16 %v256
    %v422 = vunpack.c.h.b16 %v256
    %v423 = vunpack.c.l.b16 %v257
    %v424 = vunpack.c.h.b16 %v257
    %v425 = vunpack.c.l.b16 %v258
    %v426 = vunpack.c.h.b16 %v258
    %v427 = vunpack.c.l.b16 %v259
    %v428 = vunpack.c.h.b16 %v259
    %v429 = vunpack.c.l.b16 %v260
    %v430 = vunpack.c.h.b16 %v260
    %v431 = vunpack.c.l.b16 %v261
    %v432 = vunpack.c.h.b16 %v261
    %v433 = vunpack.c.l.b16 %v262
    %v434 = vunpack.c.h.b16 %v262
    %v435 = vunpack.c.l.b16 %v263
    %v436 = vunpack.c.h.b16 %v263
    %v437 = vunpack.c.l.b16 %v264
    %v438 = vunpack.c.h.b16 %v264
    %v439 = vunpack.c.l.b16 %v265
    %v440 = vunpack.c.h.b16 %v265
    %v441 = vunpack.c.l.b16 %v266
    %v442 = vunpack.c.h.b16 %v266
    %v443 = vunpack.c.l.b16 %v267
    %v444 = vunpack.c.h.b16 %v267
    %v445 = vunpack.c.l.b16 %v268
    %v446 = vunpack.c.h.b16 %v268
    %v447 = vunpack.c.l.b16 %v269
    %v448 = vunpack.c.h.b16 %v269
    %v449 = vunpack.c.l.b16 %v270
    %v450 = vunpack.c.h.b16 %v270
    %v451 = vunpack.c.l.b16 %v271
    %v452 = vunpack.c.h.b16 %v271
    %v453 = vunpack.c.l.b16 %v272
    %v454 = vunpack.c.h.b16 %v272
    %v455 = vunpack.c.l.b16 %v273
    %v456 = vunpack.c.h.b16 %v273
    %v457 = vunpack.c.l.b16 %v274
    %v458 = vunpack.c.h.b16 %v274
    %v459 = vunpack.c.l.b16 %v275
    %v460 = vunpack.c.h.b16 %v275
    %v461 = vunpack.c.l.b16 %v276
    %v462 = vunpack.c.h.b16 %v276
    %v463 = vunpack.c.l.b16 %v277
    %v464 = vunpack.c.h.b16 %v277
    %v465 = vunpack.c.l.b16 %v278
    %v466 = vunpack.c.h.b16 %v278
    %v467 = vunpack.c.l.b16 %v279
    %v468 = vunpack.c.h.b16 %v279
    %v469 = vunpack.c.l.b16 %v280
    %v470 = vunpack.c.h.b16 %v280
    %v471 = vunpack.c.l.b16 %v281
    %v472 = vunpack.c.h.b16 %v281
    %v473 = vunpack.c.l.b16 %v282
    %v474 = vunpack.c.h.b16 %v282
    %v475 = vunpack.c.l.b16 %v283
    %v476 = vunpack.c.h.b16 %v283
    %v477 = vunpack.c.l.b16 %v284
    %v478 = vunpack.c.h.b16 %v284
    %v479 = vunpack.c.l.b16 %v285
    %v480 = vunpack.c.h.b16 %v285
    %v481 = vunpack.c.l.b16 %v286
    %v482 = vunpack.c.h.b16 %v286
    %v483 = vunpack.c.l.b16 %v287
    %v484 = vunpack.c.h.b16 %v287
    %v485 = vunpack.c.l.b16 %v288
    %v486 = vunpack.c.h.b16 %v288
    %v487 = vunpack.c.l.b16 %v289
    %v488 = vunpack.c.h.b16 %v289
    %v489 = vunpack.c.l.b16 %v290
    %v490 = vunpack.c.h.b16 %v290
    %v491 = vunpack.c.l.b16 %v291
    %v492 = vunpack.c.h.b16 %v291
    %v493 = vunpack.c.l.b16 %v292
    %v494 = vunpack.c.h.b16 %v292
    %v495 = vpack.c.b16 %v371, %v367
    %v496 = vpack.c.b16 %v372, %v368
    %v497 = vpack.c.b16 %v373, %v369
    %v498 = vpack.c.b16 %v374, %v370
    %v499 = vpack.c.b16 %v379, %v375
    %v500 = vpack.c.b16 %v380, %v376
    %v501 = vpack.c.b16 %v381, %v377
    %v502 = vpack.c.b16 %v382, %v378
    %v503 = vpack.c.b16 %v387, %v383
    %v504 = vpack.c.b16 %v388, %v384
    %v505 = vpack.c.b16 %v389, %v385
    %v506 = vpack.c.b16 %v390, %v386
    %v507 = vpack.c.b16 %v395, %v391
    %v508 = vpack.c.b16 %v396, %v392
    %v509 = vpack.c.b16 %v397, %v393
    %v510 = vpack.c.b16 %v398, %v394
    %v511 = vpack.c.b16 %v403, %v399
    %v512 = vpack.c.b16 %v404, %v400
    %v513 = vpack.c.b16 %v405, %v401
    %v514 = vpack.c.b16 %v406, %v402
    %v515 = vpack.c.b16 %v411, %v407
    %v516 = vpack.c.b16 %v412, %v408
    %v517 = vpack.c.b16 %v413, %v409
    %v518 = vpack.c.b16 %v414, %v410
    %v519 = vpack.c.b16 %v419, %v415
    %v520 = vpack.c.b16 %v420, %v416
    %v521 = vpack.c.b16 %v421, %v417
    %v522 = vpack.c.b16 %v422, %v418
    %v523 = vpack.c.b16 %v427, %v423
    %v524 = vpack.c.b16 %v428, %v424
    %v525 = vpack.c.b16 %v429, %v425
    %v526 = vpack.c.b16 %v430, %v426
    %v527 = vpack.c.b16 %v435, %v431
    %v528 = vpack.c.b16 %v436, %v432
    %v529 = vpack.c.b16 %v437, %v433
    %v530 = vpack.c.b16 %v438, %v434
    %v531 = vpack.c.b16 %v443, %v439
    %v532 = vpack.c.b16 %v444, %v440
    %v533 = vpack.c.b16 %v445, %v441
    %v534 = vpack.c.b16 %v446, %v442
    %v535 = vpack.c.b16 %v451, %v447
    %v536 = vpack.c.b16 %v452, %v448
    %v537 = vpack.c.b16 %v453, %v449
    %v538 = vpack.c.b16 %v454, %v450
    %v539 = vpack.c.b16 %v459, %v455
    %v540 = vpack.c.b16 %v460, %v456
    %v541 = vpack.c.b16 %v461, %v457
    %v542 = vpack.c.b16 %v462, %v458
    %v543 = vpack.c.b16 %v467, %v463
    %v544 = vpack.c.b16 %v468, %v464
    %v545 = vpack.c.b16 %v469, %v465
    %v546 = vpack.c.b16 %v470, %v466
    %v547 = vpack.c.b16 %v475, %v471
    %v548 = vpack.c.b16 %v476, %v472
    %v549 = vpack.c.b16 %v477, %v473
    %v550 = vpack.c.b16 %v478, %v474
    %v551 = vpack.c.b16 %v483, %v479
    %v552 = vpack.c.b16 %v484, %v480
    %v553 = vpack.c.b16 %v485, %v481
    %v554 = vpack.c.b16 %v486, %v482
    %v555 = vpack.c.b16 %v491, %v487
    %v556 = vpack.c.b16 %v492, %v488
    %v557 = vpack.c.b16 %v493, %v489
    %v558 = vpack.c.b16 %v494, %v490
    %623 = vmatpush.bf16.msra.mxu0 %v523
    %624 = vmatpush.bf16.msra.mxu0 %v519
    %625 = vmatpush.bf16.msra.mxu0 %v515
    %626 = vmatpush.bf16.msra.mxu0 %v511
    %627 = vmatpush.bf16.msra.mxu0 %v507
    %628 = vmatpush.bf16.msra.mxu0 %v503
    %629 = vmatpush.bf16.msra.mxu0 %v499
    %630 = vmatpush.bf16.msra.mxu0 %v495
    %631 = vmatmul.bf16.gmra.mxu0 %v227
    %v632 = vpop.f32.mrf.mxu0
    %v633 = vadd.f32 %v295, %v632
    %v634 = vpop.f32.mrf.mxu0
    %635 = vdwg.mxu0
    %636 = vmatpush.bf16.msra.mxu0 %v555
    %637 = vmatpush.bf16.msra.mxu0 %v551
    %638 = vmatpush.bf16.msra.mxu0 %v547
    %639 = vmatpush.bf16.msra.mxu0 %v543
    %640 = vmatpush.bf16.msra.mxu0 %v539
    %641 = vmatpush.bf16.msra.mxu0 %v535
    %642 = vmatpush.bf16.msra.mxu0 %v531
    %643 = vmatpush.bf16.msra.mxu0 %v527
    %644 = vmatmul.bf16.gmra.mxu0 %v228
    %v645 = vpop.f32.mrf.mxu0
    %v646 = vadd.f32 %v633, %v645
    %v647 = vpop.f32.mrf.mxu0
    %648 = vdwg.mxu0
    %649 = vmatpush.bf16.msra.mxu0 %v524
    %650 = vmatpush.bf16.msra.mxu0 %v520
    %651 = vmatpush.bf16.msra.mxu0 %v516
    %652 = vmatpush.bf16.msra.mxu0 %v512
    %653 = vmatpush.bf16.msra.mxu0 %v508
    %654 = vmatpush.bf16.msra.mxu0 %v504
    %655 = vmatpush.bf16.msra.mxu0 %v500
    %656 = vmatpush.bf16.msra.mxu0 %v496
    %657 = vmatmul.bf16.gmra.mxu0 %v227
    %v658 = vpop.f32.mrf.mxu0
    %v659 = vadd.f32 %v296, %v658
    %v660 = vpop.f32.mrf.mxu0
    %661 = vdwg.mxu0
    %662 = vmatpush.bf16.msra.mxu0 %v556
    %663 = vmatpush.bf16.msra.mxu0 %v552
    %664 = vmatpush.bf16.msra.mxu0 %v548
    %665 = vmatpush.bf16.msra.mxu0 %v544
    %666 = vmatpush.bf16.msra.mxu0 %v540
    %667 = vmatpush.bf16.msra.mxu0 %v536
    %668 = vmatpush.bf16.msra.mxu0 %v532
    %669 = vmatpush.bf16.msra.mxu0 %v528
    %670 = vmatmul.bf16.gmra.mxu0 %v228
    %v671 = vpop.f32.mrf.mxu0
    %v672 = vadd.f32 %v659, %v671
    %v673 = vpop.f32.mrf.mxu0
    %674 = vdwg.mxu0
    %675 = vmatpush.bf16.msra.mxu0 %v525
    %676 = vmatpush.bf16.msra.mxu0 %v521
    %677 = vmatpush.bf16.msra.mxu0 %v517
    %678 = vmatpush.bf16.msra.mxu0 %v513
    %679 = vmatpush.bf16.msra.mxu0 %v509
    %680 = vmatpush.bf16.msra.mxu0 %v505
    %681 = vmatpush.bf16.msra.mxu0 %v501
    %682 = vmatpush.bf16.msra.mxu0 %v497
    %683 = vmatmul.bf16.gmra.mxu0 %v227
    %v684 = vpop.f32.mrf.mxu0
    %v685 = vadd.f32 %v297, %v684
    %v686 = vpop.f32.mrf.mxu0
    %687 = vdwg.mxu0
    %688 = vmatpush.bf16.msra.mxu0 %v557
    %689 = vmatpush.bf16.msra.mxu0 %v553
    %690 = vmatpush.bf16.msra.mxu0 %v549
    %691 = vmatpush.bf16.msra.mxu0 %v545
    %692 = vmatpush.bf16.msra.mxu0 %v541
    %693 = vmatpush.bf16.msra.mxu0 %v537
    %694 = vmatpush.bf16.msra.mxu0 %v533
    %695 = vmatpush.bf16.msra.mxu0 %v529
    %696 = vmatmul.bf16.gmra.mxu0 %v228
    %v697 = vpop.f32.mrf.mxu0
    %v698 = vadd.f32 %v685, %v697
    %v699 = vpop.f32.mrf.mxu0
    %700 = vdwg.mxu0
    %701 = vmatpush.bf16.msra.mxu0 %v526
    %702 = vmatpush.bf16.msra.mxu0 %v522
    %703 = vmatpush.bf16.msra.mxu0 %v518
    %704 = vmatpush.bf16.msra.mxu0 %v514
    %705 = vmatpush.bf16.msra.mxu0 %v510
    %706 = vmatpush.bf16.msra.mxu0 %v506
    %707 = vmatpush.bf16.msra.mxu0 %v502
    %708 = vmatpush.bf16.msra.mxu0 %v498
    %709 = vmatmul.bf16.gmra.mxu0 %v227
    %v710 = vpop.f32.mrf.mxu0
    %v711 = vadd.f32 %v298, %v710
    %v712 = vpop.f32.mrf.mxu0
    %713 = vdwg.mxu0
    %714 = vmatpush.bf16.msra.mxu0 %v558
    %715 = vmatpush.bf16.msra.mxu0 %v554
    %716 = vmatpush.bf16.msra.mxu0 %v550
    %717 = vmatpush.bf16.msra.mxu0 %v546
    %718 = vmatpush.bf16.msra.mxu0 %v542
    %719 = vmatpush.bf16.msra.mxu0 %v538
    %720 = vmatpush.bf16.msra.mxu0 %v534
    %721 = vmatpush.bf16.msra.mxu0 %v530
    %722 = vmatmul.bf16.gmra.mxu0 %v228
    %v723 = vpop.f32.mrf.mxu0
    %v724 = vadd.f32 %v711, %v723
    %v725 = vpop.f32.mrf.mxu0
    %726 = vdwg.mxu0
    %vm727 = vcmp.ge.f32.partialorder %v646, 0.0
    %vm728 = vcmp.ge.f32.partialorder %v672, 0.0
    %vm729 = vcmp.ge.f32.partialorder %v698, 0.0
    %vm730 = vcmp.ge.f32.partialorder %v724, 0.0
    %v731 = vmul.f32 %v646, 0.1
    %v732 = vmul.f32 %v672, 0.1
    %v733 = vmul.f32 %v698, 0.1
    %v734 = vmul.f32 %v724, 0.1
    %v735 = vsel %vm727, %v646, %v731
    %v736 = vsel %vm728, %v672, %v732
    %v737 = vsel %vm729, %v698, %v733
    %v738 = vsel %vm730, %v724, %v734
    %v739 = vpack.c.bf16 %v735, %v735
    %v740 = vpack.c.bf16 %v736, %v736
    %v741 = vpack.c.bf16 %v737, %v737
    %v742 = vpack.c.bf16 %v738, %v738
    %v743 = vld [vmem:[%s7] sm:$0xff]
    %v744 = vld [vmem:[%s7 + $0x8] sm:$0xff]
    %v745 = vld [vmem:[%s7 + $0x10] sm:$0xff]
    %v746 = vld [vmem:[%s7 + $0x18] sm:$0xf]
    %v747 = vld [vmem:[%s7 + $0x1c] sm:$0xff]
    %v748 = vld [vmem:[%s7 + $0x24] sm:$0xff]
    %v749 = vld [vmem:[%s7 + $0x2c] sm:$0xff]
    %v750 = vld [vmem:[%s7 + $0x34] sm:$0xf]
    %v751 = vld [vmem:[%s7 + $0x38] sm:$0xff]
    %v752 = vld [vmem:[%s7 + $0x40] sm:$0xff]
    %v753 = vld [vmem:[%s7 + $0x48] sm:$0xff]
    %v754 = vld [vmem:[%s7 + $0x50] sm:$0xf]
    %v755 = vld [vmem:[%s7 + $0x54] sm:$0xff]
    %v756 = vld [vmem:[%s7 + $0x5c] sm:$0xff]
    %v757 = vld [vmem:[%s7 + $0x64] sm:$0xff]
    %v758 = vld [vmem:[%s7 + $0x6c] sm:$0xf]
    %v759 = vld [vmem:[%s7 + $0x70] sm:$0xff]
    %v760 = vld [vmem:[%s7 + $0x78] sm:$0xff]
    %v761 = vld [vmem:[%s7 + $0x80] sm:$0xff]
    %v762 = vld [vmem:[%s7 + $0x88] sm:$0xf]
    %v763 = vld [vmem:[%s7 + $0x8c] sm:$0xff]
    %v764 = vld [vmem:[%s7 + $0x94] sm:$0xff]
    %v765 = vld [vmem:[%s7 + $0x9c] sm:$0xff]
    %v766 = vld [vmem:[%s7 + $0xa4] sm:$0xf]
    %v767 = vld [vmem:[%s7 + $0xa8] sm:$0xff]
    %v768 = vld [vmem:[%s7 + $0xb0] sm:$0xff]
    %v769 = vld [vmem:[%s7 + $0xb8] sm:$0xff]
    %v770 = vld [vmem:[%s7 + $0xc0] sm:$0xf]
    %v771 = vld [vmem:[%s7 + $0xc4] sm:$0xff]
    %v772 = vld [vmem:[%s7 + $0xcc] sm:$0xff]
    %v773 = vld [vmem:[%s7 + $0xd4] sm:$0xff]
    %v774 = vld [vmem:[%s7 + $0xdc] sm:$0xf]
    %v775 = vld [vmem:[%s7 + $0xe0] sm:$0xff]
    %v776 = vld [vmem:[%s7 + $0xe8] sm:$0xff]
    %v777 = vld [vmem:[%s7 + $0xf0] sm:$0xff]
    %v778 = vld [vmem:[%s7 + $0xf8] sm:$0xf]
    %v779 = vld [vmem:[%s7 + $0xfc] sm:$0xff]
    %v780 = vld [vmem:[%s7 + $0x104] sm:$0xff]
    %v781 = vld [vmem:[%s7 + $0x10c] sm:$0xff]
    %v782 = vld [vmem:[%s7 + $0x114] sm:$0xf]
    %v783 = vld [vmem:[%s7 + $0x118] sm:$0xff]
    %v784 = vld [vmem:[%s7 + $0x120] sm:$0xff]
    %v785 = vld [vmem:[%s7 + $0x128] sm:$0xff]
    %v786 = vld [vmem:[%s7 + $0x130] sm:$0xf]
    %v787 = vld [vmem:[%s7 + $0x134] sm:$0xff]
    %v788 = vld [vmem:[%s7 + $0x13c] sm:$0xff]
    %v789 = vld [vmem:[%s7 + $0x144] sm:$0xff]
    %v790 = vld [vmem:[%s7 + $0x14c] sm:$0xf]
    %v791 = vld [vmem:[%s7 + $0x150] sm:$0xff]
    %v792 = vld [vmem:[%s7 + $0x158] sm:$0xff]
    %v793 = vld [vmem:[%s7 + $0x160] sm:$0xff]
    %v794 = vld [vmem:[%s7 + $0x168] sm:$0xf]
    %v795 = vld [vmem:[%s7 + $0x16c] sm:$0xff]
    %v796 = vld [vmem:[%s7 + $0x174] sm:$0xff]
    %v797 = vld [vmem:[%s7 + $0x17c] sm:$0xff]
    %v798 = vld [vmem:[%s7 + $0x184] sm:$0xf]
    %v799 = vld [vmem:[%s7 + $0x188] sm:$0xff]
    %v800 = vld [vmem:[%s7 + $0x190] sm:$0xff]
    %v801 = vld [vmem:[%s7 + $0x198] sm:$0xff]
    %v802 = vld [vmem:[%s7 + $0x1a0] sm:$0xf]
    %v803 = vld [vmem:[%s7 + $0x1a4] sm:$0xff]
    %v804 = vld [vmem:[%s7 + $0x1ac] sm:$0xff]
    %v805 = vld [vmem:[%s7 + $0x1b4] sm:$0xff]
    %v806 = vld [vmem:[%s7 + $0x1bc] sm:$0xf]
    %v807 = vld [vmem:[%s7 + $0x1c0] sm:$0xff]
    %v808 = vld [vmem:[%s7 + $0x1c8] sm:$0xff]
    %v809 = vld [vmem:[%s7 + $0x1d0] sm:$0xff]
    %v810 = vld [vmem:[%s7 + $0x1d8] sm:$0xf]
    %v811 = vld [vmem:[%s7 + $0x1dc] sm:$0xff]
    %v812 = vld [vmem:[%s7 + $0x1e4] sm:$0xff]
    %v813 = vld [vmem:[%s7 + $0x1ec] sm:$0xff]
    %v814 = vld [vmem:[%s7 + $0x1f4] sm:$0xf]
    %v815 = vld [vmem:[%s7 + $0x1f8] sm:$0xff]
    %v816 = vld [vmem:[%s7 + $0x200] sm:$0xff]
    %v817 = vld [vmem:[%s7 + $0x208] sm:$0xff]
    %v818 = vld [vmem:[%s7 + $0x210] sm:$0xf]
    %v819 = vld [vmem:[%s7 + $0x214] sm:$0xff]
    %v820 = vld [vmem:[%s7 + $0x21c] sm:$0xff]
    %v821 = vld [vmem:[%s7 + $0x224] sm:$0xff]
    %v822 = vld [vmem:[%s7 + $0x22c] sm:$0xf]
    %v823 = vld [vmem:[%s7 + $0x230] sm:$0xff]
    %v824 = vld [vmem:[%s7 + $0x238] sm:$0xff]
    %v825 = vld [vmem:[%s7 + $0x240] sm:$0xff]
    %v826 = vld [vmem:[%s7 + $0x248] sm:$0xf]
    %v827 = vld [vmem:[%s7 + $0x24c] sm:$0xff]
    %v828 = vld [vmem:[%s7 + $0x254] sm:$0xff]
    %v829 = vld [vmem:[%s7 + $0x25c] sm:$0xff]
    %v830 = vld [vmem:[%s7 + $0x264] sm:$0xf]
    %v831 = vld [vmem:[%s7 + $0x268] sm:$0xff]
    %v832 = vld [vmem:[%s7 + $0x270] sm:$0xff]
    %v833 = vld [vmem:[%s7 + $0x278] sm:$0xff]
    %v834 = vld [vmem:[%s7 + $0x280] sm:$0xf]
    %v835 = vld [vmem:[%s7 + $0x284] sm:$0xff]
    %v836 = vld [vmem:[%s7 + $0x28c] sm:$0xff]
    %v837 = vld [vmem:[%s7 + $0x294] sm:$0xff]
    %v838 = vld [vmem:[%s7 + $0x29c] sm:$0xf]
    %v839 = vld [vmem:[%s7 + $0x2a0] sm:$0xff]
    %v840 = vld [vmem:[%s7 + $0x2a8] sm:$0xff]
    %v841 = vld [vmem:[%s7 + $0x2b0] sm:$0xff]
    %v842 = vld [vmem:[%s7 + $0x2b8] sm:$0xf]
    %v843 = vld [vmem:[%s7 + $0x2bc] sm:$0xff]
    %v844 = vld [vmem:[%s7 + $0x2c4] sm:$0xff]
    %v845 = vld [vmem:[%s7 + $0x2cc] sm:$0xff]
    %v846 = vld [vmem:[%s7 + $0x2d4] sm:$0xf]
    %v847 = vld [vmem:[%s7 + $0x2d8] sm:$0xff]
    %v848 = vld [vmem:[%s7 + $0x2e0] sm:$0xff]
    %v849 = vld [vmem:[%s7 + $0x2e8] sm:$0xff]
    %v850 = vld [vmem:[%s7 + $0x2f0] sm:$0xf]
    %v851 = vld [vmem:[%s7 + $0x2f4] sm:$0xff]
    %v852 = vld [vmem:[%s7 + $0x2fc] sm:$0xff]
    %v853 = vld [vmem:[%s7 + $0x304] sm:$0xff]
    %v854 = vld [vmem:[%s7 + $0x30c] sm:$0xf]
    %v855 = vld [vmem:[%s7 + $0x310] sm:$0xff]
    %v856 = vld [vmem:[%s7 + $0x318] sm:$0xff]
    %v857 = vld [vmem:[%s7 + $0x320] sm:$0xff]
    %v858 = vld [vmem:[%s7 + $0x328] sm:$0xf]
    %v859 = vld [vmem:[%s7 + $0x32c] sm:$0xff]
    %v860 = vld [vmem:[%s7 + $0x334] sm:$0xff]
    %v861 = vld [vmem:[%s7 + $0x33c] sm:$0xff]
    %v862 = vld [vmem:[%s7 + $0x344] sm:$0xf]
    %v863 = vld [vmem:[%s7 + $0x348] sm:$0xff]
    %v864 = vld [vmem:[%s7 + $0x350] sm:$0xff]
    %v865 = vld [vmem:[%s7 + $0x358] sm:$0xff]
    %v866 = vld [vmem:[%s7 + $0x360] sm:$0xf]
    %v867 = vld [vmem:[%s7 + $0x364] sm:$0xff]
    %v868 = vld [vmem:[%s7 + $0x36c] sm:$0xff]
    %v869 = vld [vmem:[%s7 + $0x374] sm:$0xff]
    %v870 = vld [vmem:[%s7 + $0x37c] sm:$0xf]
    %v871 = vld [vmem:[%s7 + $0x380] sm:$0xff]
    %v872 = vld [vmem:[%s7 + $0x388] sm:$0xff]
    %v873 = vld [vmem:[%s7 + $0x390] sm:$0xff]
    %v874 = vld [vmem:[%s7 + $0x398] sm:$0xf]
    %v875 = vld [vmem:[%s7 + $0x39c] sm:$0xff]
    %v876 = vld [vmem:[%s7 + $0x3a4] sm:$0xff]
    %v877 = vld [vmem:[%s7 + $0x3ac] sm:$0xff]
    %v878 = vld [vmem:[%s7 + $0x3b4] sm:$0xf]
    %v879 = vld [vmem:[%s7 + $0x3b8] sm:$0xff]
    %v880 = vld [vmem:[%s7 + $0x3c0] sm:$0xff]
    %v881 = vld [vmem:[%s7 + $0x3c8] sm:$0xff]
    %v882 = vld [vmem:[%s7 + $0x3d0] sm:$0xf]
    %v883 = vld [vmem:[%s7 + $0x3d4] sm:$0xff]
    %v884 = vld [vmem:[%s7 + $0x3dc] sm:$0xff]
    %v885 = vld [vmem:[%s7 + $0x3e4] sm:$0xff]
    %v886 = vld [vmem:[%s7 + $0x3ec] sm:$0xf]
    %v887 = vld [vmem:[%s7 + $0x3f0] sm:$0xff]
    %v888 = vld [vmem:[%s7 + $0x3f8] sm:$0xff]
    %v889 = vld [vmem:[%s7 + $0x400] sm:$0xff]
    %v890 = vld [vmem:[%s7 + $0x408] sm:$0xf]
    %v891 = vld [vmem:[%s7 + $0x40c] sm:$0xff]
    %v892 = vld [vmem:[%s7 + $0x414] sm:$0xff]
    %v893 = vld [vmem:[%s7 + $0x41c] sm:$0xff]
    %v894 = vld [vmem:[%s7 + $0x424] sm:$0xf]
    %v895 = vld [vmem:[%s7 + $0x428] sm:$0xff]
    %v896 = vld [vmem:[%s7 + $0x430] sm:$0xff]
    %v897 = vld [vmem:[%s7 + $0x438] sm:$0xff]
    %v898 = vld [vmem:[%s7 + $0x440] sm:$0xf]
    %v899 = vld [vmem:[%s7 + $0x444] sm:$0xff]
    %v900 = vld [vmem:[%s7 + $0x44c] sm:$0xff]
    %v901 = vld [vmem:[%s7 + $0x454] sm:$0xff]
    %v902 = vld [vmem:[%s7 + $0x45c] sm:$0xf]
    %v903 = vld [vmem:[%s7 + $0x460] sm:$0xff]
    %v904 = vld [vmem:[%s7 + $0x468] sm:$0xff]
    %v905 = vld [vmem:[%s7 + $0x470] sm:$0xff]
    %v906 = vld [vmem:[%s7 + $0x478] sm:$0xf]
    %v907 = vld [vmem:[%s7 + $0x47c] sm:$0xff]
    %v908 = vld [vmem:[%s7 + $0x484] sm:$0xff]
    %v909 = vld [vmem:[%s7 + $0x48c] sm:$0xff]
    %v910 = vld [vmem:[%s7 + $0x494] sm:$0xf]
    %v911 = vld [vmem:[%s7 + $0x498] sm:$0xff]
    %v912 = vld [vmem:[%s7 + $0x4a0] sm:$0xff]
    %v913 = vld [vmem:[%s7 + $0x4a8] sm:$0xff]
    %v914 = vld [vmem:[%s7 + $0x4b0] sm:$0xf]
    %v915 = vld [vmem:[%s7 + $0x4b4] sm:$0xff]
    %v916 = vld [vmem:[%s7 + $0x4bc] sm:$0xff]
    %v917 = vld [vmem:[%s7 + $0x4c4] sm:$0xff]
    %v918 = vld [vmem:[%s7 + $0x4cc] sm:$0xf]
    %v919 = vld [vmem:[%s7 + $0x4d0] sm:$0xff]
    %v920 = vld [vmem:[%s7 + $0x4d8] sm:$0xff]
    %v921 = vld [vmem:[%s7 + $0x4e0] sm:$0xff]
    %v922 = vld [vmem:[%s7 + $0x4e8] sm:$0xf]
    %v923 = vld [vmem:[%s7 + $0x4ec] sm:$0xff]
    %v924 = vld [vmem:[%s7 + $0x4f4] sm:$0xff]
    %v925 = vld [vmem:[%s7 + $0x4fc] sm:$0xff]
    %v926 = vld [vmem:[%s7 + $0x504] sm:$0xf]
    %v927 = vld [vmem:[%s7 + $0x508] sm:$0xff]
    %v928 = vld [vmem:[%s7 + $0x510] sm:$0xff]
    %v929 = vld [vmem:[%s7 + $0x518] sm:$0xff]
    %v930 = vld [vmem:[%s7 + $0x520] sm:$0xf]
    %v931 = vld [vmem:[%s7 + $0x524] sm:$0xff]
    %v932 = vld [vmem:[%s7 + $0x52c] sm:$0xff]
    %v933 = vld [vmem:[%s7 + $0x534] sm:$0xff]
    %v934 = vld [vmem:[%s7 + $0x53c] sm:$0xf]
    %v935 = vld [vmem:[%s7 + $0x540] sm:$0xff]
    %v936 = vld [vmem:[%s7 + $0x548] sm:$0xff]
    %v937 = vld [vmem:[%s7 + $0x550] sm:$0xff]
    %v938 = vld [vmem:[%s7 + $0x558] sm:$0xf]
    %v939 = vld [vmem:[%s7 + $0x55c] sm:$0xff]
    %v940 = vld [vmem:[%s7 + $0x564] sm:$0xff]
    %v941 = vld [vmem:[%s7 + $0x56c] sm:$0xff]
    %v942 = vld [vmem:[%s7 + $0x574] sm:$0xf]
    %v943 = vld [vmem:[%s7 + $0x578] sm:$0xff]
    %v944 = vld [vmem:[%s7 + $0x580] sm:$0xff]
    %v945 = vld [vmem:[%s7 + $0x588] sm:$0xff]
    %v946 = vld [vmem:[%s7 + $0x590] sm:$0xf]
    %v947 = vld [vmem:[%s7 + $0x594] sm:$0xff]
    %v948 = vld [vmem:[%s7 + $0x59c] sm:$0xff]
    %v949 = vld [vmem:[%s7 + $0x5a4] sm:$0xff]
    %v950 = vld [vmem:[%s7 + $0x5ac] sm:$0xf]
    %v951 = vld [vmem:[%s7 + $0x5b0] sm:$0xff]
    %v952 = vld [vmem:[%s7 + $0x5b8] sm:$0xff]
    %v953 = vld [vmem:[%s7 + $0x5c0] sm:$0xff]
    %v954 = vld [vmem:[%s7 + $0x5c8] sm:$0xf]
    %v955 = vld [vmem:[%s7 + $0x5cc] sm:$0xff]
    %v956 = vld [vmem:[%s7 + $0x5d4] sm:$0xff]
    %v957 = vld [vmem:[%s7 + $0x5dc] sm:$0xff]
    %v958 = vld [vmem:[%s7 + $0x5e4] sm:$0xf]
    %v959 = vld [vmem:[%s7 + $0x5e8] sm:$0xff]
    %v960 = vld [vmem:[%s7 + $0x5f0] sm:$0xff]
    %v961 = vld [vmem:[%s7 + $0x5f8] sm:$0xff]
    %v962 = vld [vmem:[%s7 + $0x600] sm:$0xf]
    %v963 = vld [vmem:[%s7 + $0x604] sm:$0xff]
    %v964 = vld [vmem:[%s7 + $0x60c] sm:$0xff]
    %v965 = vld [vmem:[%s7 + $0x614] sm:$0xff]
    %v966 = vld [vmem:[%s7 + $0x61c] sm:$0xf]
    %v967 = vld [vmem:[%s7 + $0x620] sm:$0xff]
    %v968 = vld [vmem:[%s7 + $0x628] sm:$0xff]
    %v969 = vld [vmem:[%s7 + $0x630] sm:$0xff]
    %v970 = vld [vmem:[%s7 + $0x638] sm:$0xf]
    %v971 = vld [vmem:[%s7 + $0x63c] sm:$0xff]
    %v972 = vld [vmem:[%s7 + $0x644] sm:$0xff]
    %v973 = vld [vmem:[%s7 + $0x64c] sm:$0xff]
    %v974 = vld [vmem:[%s7 + $0x654] sm:$0xf]
    %v975 = vld [vmem:[%s7 + $0x658] sm:$0xff]
    %v976 = vld [vmem:[%s7 + $0x660] sm:$0xff]
    %v977 = vld [vmem:[%s7 + $0x668] sm:$0xff]
    %v978 = vld [vmem:[%s7 + $0x670] sm:$0xf]
    %v979 = vld [vmem:[%s7 + $0x674] sm:$0xff]
    %v980 = vld [vmem:[%s7 + $0x67c] sm:$0xff]
    %v981 = vld [vmem:[%s7 + $0x684] sm:$0xff]
    %v982 = vld [vmem:[%s7 + $0x68c] sm:$0xf]
    %v983 = vld [vmem:[%s7 + $0x690] sm:$0xff]
    %v984 = vld [vmem:[%s7 + $0x698] sm:$0xff]
    %v985 = vld [vmem:[%s7 + $0x6a0] sm:$0xff]
    %v986 = vld [vmem:[%s7 + $0x6a8] sm:$0xf]
    %v987 = vld [vmem:[%s7 + $0x6ac] sm:$0xff]
    %v988 = vld [vmem:[%s7 + $0x6b4] sm:$0xff]
    %v989 = vld [vmem:[%s7 + $0x6bc] sm:$0xff]
    %v990 = vld [vmem:[%s7 + $0x6c4] sm:$0xf]
    %v991 = vld [vmem:[%s7 + $0x6c8] sm:$0xff]
    %v992 = vld [vmem:[%s7 + $0x6d0] sm:$0xff]
    %v993 = vld [vmem:[%s7 + $0x6d8] sm:$0xff]
    %v994 = vld [vmem:[%s7 + $0x6e0] sm:$0xf]
    %v995 = vld [vmem:[%s7 + $0x6e4] sm:$0xff]
    %v996 = vld [vmem:[%s7 + $0x6ec] sm:$0xff]
    %v997 = vld [vmem:[%s7 + $0x6f4] sm:$0xff]
    %v998 = vld [vmem:[%s7 + $0x6fc] sm:$0xf]
    %v999 = vld [vmem:[%s8] sm:$0x7f]
    %v1001 = vperm.slane %v999, 0
    %v1002 = vperm.slane %v999, 1
    %v1003 = vperm.slane %v999, 2
    %v1004 = vperm.slane %v999, 3
    %v1005 = vperm.slane %v999, 4
    %v1006 = vperm.slane %v999, 5
    %v1007 = vperm.slane %v999, 6
    %v1271 = vunpack.c.l.b16 %v743
    %v1272 = vunpack.c.h.b16 %v743
    %v1273 = vunpack.c.l.b16 %v744
    %v1274 = vunpack.c.h.b16 %v744
    %v1275 = vunpack.c.l.b16 %v745
    %v1276 = vunpack.c.h.b16 %v745
    %v1277 = vunpack.c.l.b16 %v746
    %v1278 = vunpack.c.l.b16 %v747
    %v1279 = vunpack.c.h.b16 %v747
    %v1280 = vunpack.c.l.b16 %v748
    %v1281 = vunpack.c.h.b16 %v748
    %v1282 = vunpack.c.l.b16 %v749
    %v1283 = vunpack.c.h.b16 %v749
    %v1284 = vunpack.c.l.b16 %v750
    %v1285 = vunpack.c.l.b16 %v751
    %v1286 = vunpack.c.h.b16 %v751
    %v1287 = vunpack.c.l.b16 %v752
    %v1288 = vunpack.c.h.b16 %v752
    %v1289 = vunpack.c.l.b16 %v753
    %v1290 = vunpack.c.h.b16 %v753
    %v1291 = vunpack.c.l.b16 %v754
    %v1292 = vunpack.c.l.b16 %v755
    %v1293 = vunpack.c.h.b16 %v755
    %v1294 = vunpack.c.l.b16 %v756
    %v1295 = vunpack.c.h.b16 %v756
    %v1296 = vunpack.c.l.b16 %v757
    %v1297 = vunpack.c.h.b16 %v757
    %v1298 = vunpack.c.l.b16 %v758
    %v1299 = vunpack.c.l.b16 %v759
    %v1300 = vunpack.c.h.b16 %v759
    %v1301 = vunpack.c.l.b16 %v760
    %v1302 = vunpack.c.h.b16 %v760
    %v1303 = vunpack.c.l.b16 %v761
    %v1304 = vunpack.c.h.b16 %v761
    %v1305 = vunpack.c.l.b16 %v762
    %v1306 = vunpack.c.l.b16 %v763
    %v1307 = vunpack.c.h.b16 %v763
    %v1308 = vunpack.c.l.b16 %v764
    %v1309 = vunpack.c.h.b16 %v764
    %v1310 = vunpack.c.l.b16 %v765
    %v1311 = vunpack.c.h.b16 %v765
    %v1312 = vunpack.c.l.b16 %v766
    %v1313 = vunpack.c.l.b16 %v767
    %v1314 = vunpack.c.h.b16 %v767
    %v1315 = vunpack.c.l.b16 %v768
    %v1316 = vunpack.c.h.b16 %v768
    %v1317 = vunpack.c.l.b16 %v769
    %v1318 = vunpack.c.h.b16 %v769
    %v1319 = vunpack.c.l.b16 %v770
    %v1320 = vunpack.c.l.b16 %v771
    %v1321 = vunpack.c.h.b16 %v771
    %v1322 = vunpack.c.l.b16 %v772
    %v1323 = vunpack.c.h.b16 %v772
    %v1324 = vunpack.c.l.b16 %v773
    %v1325 = vunpack.c.h.b16 %v773
    %v1326 = vunpack.c.l.b16 %v774
    %v1327 = vunpack.c.l.b16 %v775
    %v1328 = vunpack.c.h.b16 %v775
    %v1329 = vunpack.c.l.b16 %v776
    %v1330 = vunpack.c.h.b16 %v776
    %v1331 = vunpack.c.l.b16 %v777
    %v1332 = vunpack.c.h.b16 %v777
    %v1333 = vunpack.c.l.b16 %v778
    %v1334 = vunpack.c.l.b16 %v779
    %v1335 = vunpack.c.h.b16 %v779
    %v1336 = vunpack.c.l.b16 %v780
    %v1337 = vunpack.c.h.b16 %v780
    %v1338 = vunpack.c.l.b16 %v781
    %v1339 = vunpack.c.h.b16 %v781
    %v1340 = vunpack.c.l.b16 %v782
    %v1341 = vunpack.c.l.b16 %v783
    %v1342 = vunpack.c.h.b16 %v783
    %v1343 = vunpack.c.l.b16 %v784
    %v1344 = vunpack.c.h.b16 %v784
    %v1345 = vunpack.c.l.b16 %v785
    %v1346 = vunpack.c.h.b16 %v785
    %v1347 = vunpack.c.l.b16 %v786
    %v1348 = vunpack.c.l.b16 %v787
    %v1349 = vunpack.c.h.b16 %v787
    %v1350 = vunpack.c.l.b16 %v788
    %v1351 = vunpack.c.h.b16 %v788
    %v1352 = vunpack.c.l.b16 %v789
    %v1353 = vunpack.c.h.b16 %v789
    %v1354 = vunpack.c.l.b16 %v790
    %v1355 = vunpack.c.l.b16 %v791
    %v1356 = vunpack.c.h.b16 %v791
    %v1357 = vunpack.c.l.b16 %v792
    %v1358 = vunpack.c.h.b16 %v792
    %v1359 = vunpack.c.l.b16 %v793
    %v1360 = vunpack.c.h.b16 %v793
    %v1361 = vunpack.c.l.b16 %v794
    %v1362 = vunpack.c.l.b16 %v795
    %v1363 = vunpack.c.h.b16 %v795
    %v1364 = vunpack.c.l.b16 %v796
    %v1365 = vunpack.c.h.b16 %v796
    %v1366 = vunpack.c.l.b16 %v797
    %v1367 = vunpack.c.h.b16 %v797
    %v1368 = vunpack.c.l.b16 %v798
    %v1369 = vunpack.c.l.b16 %v799
    %v1370 = vunpack.c.h.b16 %v799
    %v1371 = vunpack.c.l.b16 %v800
    %v1372 = vunpack.c.h.b16 %v800
    %v1373 = vunpack.c.l.b16 %v801
    %v1374 = vunpack.c.h.b16 %v801
    %v1375 = vunpack.c.l.b16 %v802
    %v1376 = vunpack.c.l.b16 %v803
    %v1377 = vunpack.c.h.b16 %v803
    %v1378 = vunpack.c.l.b16 %v804
    %v1379 = vunpack.c.h.b16 %v804
    %v1380 = vunpack.c.l.b16 %v805
    %v1381 = vunpack.c.h.b16 %v805
    %v1382 = vunpack.c.l.b16 %v806
    %v1383 = vunpack.c.l.b16 %v807
    %v1384 = vunpack.c.h.b16 %v807
    %v1385 = vunpack.c.l.b16 %v808
    %v1386 = vunpack.c.h.b16 %v808
    %v1387 = vunpack.c.l.b16 %v809
    %v1388 = vunpack.c.h.b16 %v809
    %v1389 = vunpack.c.l.b16 %v810
    %v1390 = vunpack.c.l.b16 %v811
    %v1391 = vunpack.c.h.b16 %v811
    %v1392 = vunpack.c.l.b16 %v812
    %v1393 = vunpack.c.h.b16 %v812
    %v1394 = vunpack.c.l.b16 %v813
    %v1395 = vunpack.c.h.b16 %v813
    %v1396 = vunpack.c.l.b16 %v814
    %v1397 = vunpack.c.l.b16 %v815
    %v1398 = vunpack.c.h.b16 %v815
    %v1399 = vunpack.c.l.b16 %v816
    %v1400 = vunpack.c.h.b16 %v816
    %v1401 = vunpack.c.l.b16 %v817
    %v1402 = vunpack.c.h.b16 %v817
    %v1403 = vunpack.c.l.b16 %v818
    %v1404 = vunpack.c.l.b16 %v819
    %v1405 = vunpack.c.h.b16 %v819
    %v1406 = vunpack.c.l.b16 %v820
    %v1407 = vunpack.c.h.b16 %v820
    %v1408 = vunpack.c.l.b16 %v821
    %v1409 = vunpack.c.h.b16 %v821
    %v1410 = vunpack.c.l.b16 %v822
    %v1411 = vunpack.c.l.b16 %v823
    %v1412 = vunpack.c.h.b16 %v823
    %v1413 = vunpack.c.l.b16 %v824
    %v1414 = vunpack.c.h.b16 %v824
    %v1415 = vunpack.c.l.b16 %v825
    %v1416 = vunpack.c.h.b16 %v825
    %v1417 = vunpack.c.l.b16 %v826
    %v1418 = vunpack.c.l.b16 %v827
    %v1419 = vunpack.c.h.b16 %v827
    %v1420 = vunpack.c.l.b16 %v828
    %v1421 = vunpack.c.h.b16 %v828
    %v1422 = vunpack.c.l.b16 %v829
    %v1423 = vunpack.c.h.b16 %v829
    %v1424 = vunpack.c.l.b16 %v830
    %v1425 = vunpack.c.l.b16 %v831
    %v1426 = vunpack.c.h.b16 %v831
    %v1427 = vunpack.c.l.b16 %v832
    %v1428 = vunpack.c.h.b16 %v832
    %v1429 = vunpack.c.l.b16 %v833
    %v1430 = vunpack.c.h.b16 %v833
    %v1431 = vunpack.c.l.b16 %v834
    %v1432 = vunpack.c.l.b16 %v835
    %v1433 = vunpack.c.h.b16 %v835
    %v1434 = vunpack.c.l.b16 %v836
    %v1435 = vunpack.c.h.b16 %v836
    %v1436 = vunpack.c.l.b16 %v837
    %v1437 = vunpack.c.h.b16 %v837
    %v1438 = vunpack.c.l.b16 %v838
    %v1439 = vunpack.c.l.b16 %v839
    %v1440 = vunpack.c.h.b16 %v839
    %v1441 = vunpack.c.l.b16 %v840
    %v1442 = vunpack.c.h.b16 %v840
    %v1443 = vunpack.c.l.b16 %v841
    %v1444 = vunpack.c.h.b16 %v841
    %v1445 = vunpack.c.l.b16 %v842
    %v1446 = vunpack.c.l.b16 %v843
    %v1447 = vunpack.c.h.b16 %v843
    %v1448 = vunpack.c.l.b16 %v844
    %v1449 = vunpack.c.h.b16 %v844
    %v1450 = vunpack.c.l.b16 %v845
    %v1451 = vunpack.c.h.b16 %v845
    %v1452 = vunpack.c.l.b16 %v846
    %v1453 = vunpack.c.l.b16 %v847
    %v1454 = vunpack.c.h.b16 %v847
    %v1455 = vunpack.c.l.b16 %v848
    %v1456 = vunpack.c.h.b16 %v848
    %v1457 = vunpack.c.l.b16 %v849
    %v1458 = vunpack.c.h.b16 %v849
    %v1459 = vunpack.c.l.b16 %v850
    %v1460 = vunpack.c.l.b16 %v851
    %v1461 = vunpack.c.h.b16 %v851
    %v1462 = vunpack.c.l.b16 %v852
    %v1463 = vunpack.c.h.b16 %v852
    %v1464 = vunpack.c.l.b16 %v853
    %v1465 = vunpack.c.h.b16 %v853
    %v1466 = vunpack.c.l.b16 %v854
    %v1467 = vunpack.c.l.b16 %v855
    %v1468 = vunpack.c.h.b16 %v855
    %v1469 = vunpack.c.l.b16 %v856
    %v1470 = vunpack.c.h.b16 %v856
    %v1471 = vunpack.c.l.b16 %v857
    %v1472 = vunpack.c.h.b16 %v857
    %v1473 = vunpack.c.l.b16 %v858
    %v1474 = vunpack.c.l.b16 %v859
    %v1475 = vunpack.c.h.b16 %v859
    %v1476 = vunpack.c.l.b16 %v860
    %v1477 = vunpack.c.h.b16 %v860
    %v1478 = vunpack.c.l.b16 %v861
    %v1479 = vunpack.c.h.b16 %v861
    %v1480 = vunpack.c.l.b16 %v862
    %v1481 = vunpack.c.l.b16 %v863
    %v1482 = vunpack.c.h.b16 %v863
    %v1483 = vunpack.c.l.b16 %v864
    %v1484 = vunpack.c.h.b16 %v864
    %v1485 = vunpack.c.l.b16 %v865
    %v1486 = vunpack.c.h.b16 %v865
    %v1487 = vunpack.c.l.b16 %v866
    %v1488 = vunpack.c.l.b16 %v867
    %v1489 = vunpack.c.h.b16 %v867
    %v1490 = vunpack.c.l.b16 %v868
    %v1491 = vunpack.c.h.b16 %v868
    %v1492 = vunpack.c.l.b16 %v869
    %v1493 = vunpack.c.h.b16 %v869
    %v1494 = vunpack.c.l.b16 %v870
    %v1495 = vunpack.c.l.b16 %v871
    %v1496 = vunpack.c.h.b16 %v871
    %v1497 = vunpack.c.l.b16 %v872
    %v1498 = vunpack.c.h.b16 %v872
    %v1499 = vunpack.c.l.b16 %v873
    %v1500 = vunpack.c.h.b16 %v873
    %v1501 = vunpack.c.l.b16 %v874
    %v1502 = vunpack.c.l.b16 %v875
    %v1503 = vunpack.c.h.b16 %v875
    %v1504 = vunpack.c.l.b16 %v876
    %v1505 = vunpack.c.h.b16 %v876
    %v1506 = vunpack.c.l.b16 %v877
    %v1507 = vunpack.c.h.b16 %v877
    %v1508 = vunpack.c.l.b16 %v878
    %v1509 = vunpack.c.l.b16 %v879
    %v1510 = vunpack.c.h.b16 %v879
    %v1511 = vunpack.c.l.b16 %v880
    %v1512 = vunpack.c.h.b16 %v880
    %v1513 = vunpack.c.l.b16 %v881
    %v1514 = vunpack.c.h.b16 %v881
    %v1515 = vunpack.c.l.b16 %v882
    %v1516 = vunpack.c.l.b16 %v883
    %v1517 = vunpack.c.h.b16 %v883
    %v1518 = vunpack.c.l.b16 %v884
    %v1519 = vunpack.c.h.b16 %v884
    %v1520 = vunpack.c.l.b16 %v885
    %v1521 = vunpack.c.h.b16 %v885
    %v1522 = vunpack.c.l.b16 %v886
    %v1523 = vunpack.c.l.b16 %v887
    %v1524 = vunpack.c.h.b16 %v887
    %v1525 = vunpack.c.l.b16 %v888
    %v1526 = vunpack.c.h.b16 %v888
    %v1527 = vunpack.c.l.b16 %v889
    %v1528 = vunpack.c.h.b16 %v889
    %v1529 = vunpack.c.l.b16 %v890
    %v1530 = vunpack.c.l.b16 %v891
    %v1531 = vunpack.c.h.b16 %v891
    %v1532 = vunpack.c.l.b16 %v892
    %v1533 = vunpack.c.h.b16 %v892
    %v1534 = vunpack.c.l.b16 %v893
    %v1535 = vunpack.c.h.b16 %v893
    %v1536 = vunpack.c.l.b16 %v894
    %v1537 = vunpack.c.l.b16 %v895
    %v1538 = vunpack.c.h.b16 %v895
    %v1539 = vunpack.c.l.b16 %v896
    %v1540 = vunpack.c.h.b16 %v896
    %v1541 = vunpack.c.l.b16 %v897
    %v1542 = vunpack.c.h.b16 %v897
    %v1543 = vunpack.c.l.b16 %v898
    %v1544 = vunpack.c.l.b16 %v899
    %v1545 = vunpack.c.h.b16 %v899
    %v1546 = vunpack.c.l.b16 %v900
    %v1547 = vunpack.c.h.b16 %v900
    %v1548 = vunpack.c.l.b16 %v901
    %v1549 = vunpack.c.h.b16 %v901
    %v1550 = vunpack.c.l.b16 %v902
    %v1551 = vunpack.c.l.b16 %v903
    %v1552 = vunpack.c.h.b16 %v903
    %v1553 = vunpack.c.l.b16 %v904
    %v1554 = vunpack.c.h.b16 %v904
    %v1555 = vunpack.c.l.b16 %v905
    %v1556 = vunpack.c.h.b16 %v905
    %v1557 = vunpack.c.l.b16 %v906
    %v1558 = vunpack.c.l.b16 %v907
    %v1559 = vunpack.c.h.b16 %v907
    %v1560 = vunpack.c.l.b16 %v908
    %v1561 = vunpack.c.h.b16 %v908
    %v1562 = vunpack.c.l.b16 %v909
    %v1563 = vunpack.c.h.b16 %v909
    %v1564 = vunpack.c.l.b16 %v910
    %v1565 = vunpack.c.l.b16 %v911
    %v1566 = vunpack.c.h.b16 %v911
    %v1567 = vunpack.c.l.b16 %v912
    %v1568 = vunpack.c.h.b16 %v912
    %v1569 = vunpack.c.l.b16 %v913
    %v1570 = vunpack.c.h.b16 %v913
    %v1571 = vunpack.c.l.b16 %v914
    %v1572 = vunpack.c.l.b16 %v915
    %v1573 = vunpack.c.h.b16 %v915
    %v1574 = vunpack.c.l.b16 %v916
    %v1575 = vunpack.c.h.b16 %v916
    %v1576 = vunpack.c.l.b16 %v917
    %v1577 = vunpack.c.h.b16 %v917
    %v1578 = vunpack.c.l.b16 %v918
    %v1579 = vunpack.c.l.b16 %v919
    %v1580 = vunpack.c.h.b16 %v919
    %v1581 = vunpack.c.l.b16 %v920
    %v1582 = vunpack.c.h.b16 %v920
    %v1583 = vunpack.c.l.b16 %v921
    %v1584 = vunpack.c.h.b16 %v921
    %v1585 = vunpack.c.l.b16 %v922
    %v1586 = vunpack.c.l.b16 %v923
    %v1587 = vunpack.c.h.b16 %v923
    %v1588 = vunpack.c.l.b16 %v924
    %v1589 = vunpack.c.h.b16 %v924
    %v1590 = vunpack.c.l.b16 %v925
    %v1591 = vunpack.c.h.b16 %v925
    %v1592 = vunpack.c.l.b16 %v926
    %v1593 = vunpack.c.l.b16 %v927
    %v1594 = vunpack.c.h.b16 %v927
    %v1595 = vunpack.c.l.b16 %v928
    %v1596 = vunpack.c.h.b16 %v928
    %v1597 = vunpack.c.l.b16 %v929
    %v1598 = vunpack.c.h.b16 %v929
    %v1599 = vunpack.c.l.b16 %v930
    %v1600 = vunpack.c.l.b16 %v931
    %v1601 = vunpack.c.h.b16 %v931
    %v1602 = vunpack.c.l.b16 %v932
    %v1603 = vunpack.c.h.b16 %v932
    %v1604 = vunpack.c.l.b16 %v933
    %v1605 = vunpack.c.h.b16 %v933
    %v1606 = vunpack.c.l.b16 %v934
    %v1607 = vunpack.c.l.b16 %v935
    %v1608 = vunpack.c.h.b16 %v935
    %v1609 = vunpack.c.l.b16 %v936
    %v1610 = vunpack.c.h.b16 %v936
    %v1611 = vunpack.c.l.b16 %v937
    %v1612 = vunpack.c.h.b16 %v937
    %v1613 = vunpack.c.l.b16 %v938
    %v1614 = vunpack.c.l.b16 %v939
    %v1615 = vunpack.c.h.b16 %v939
    %v1616 = vunpack.c.l.b16 %v940
    %v1617 = vunpack.c.h.b16 %v940
    %v1618 = vunpack.c.l.b16 %v941
    %v1619 = vunpack.c.h.b16 %v941
    %v1620 = vunpack.c.l.b16 %v942
    %v1621 = vunpack.c.l.b16 %v943
    %v1622 = vunpack.c.h.b16 %v943
    %v1623 = vunpack.c.l.b16 %v944
    %v1624 = vunpack.c.h.b16 %v944
    %v1625 = vunpack.c.l.b16 %v945
    %v1626 = vunpack.c.h.b16 %v945
    %v1627 = vunpack.c.l.b16 %v946
    %v1628 = vunpack.c.l.b16 %v947
    %v1629 = vunpack.c.h.b16 %v947
    %v1630 = vunpack.c.l.b16 %v948
    %v1631 = vunpack.c.h.b16 %v948
    %v1632 = vunpack.c.l.b16 %v949
    %v1633 = vunpack.c.h.b16 %v949
    %v1634 = vunpack.c.l.b16 %v950
    %v1635 = vunpack.c.l.b16 %v951
    %v1636 = vunpack.c.h.b16 %v951
    %v1637 = vunpack.c.l.b16 %v952
    %v1638 = vunpack.c.h.b16 %v952
    %v1639 = vunpack.c.l.b16 %v953
    %v1640 = vunpack.c.h.b16 %v953
    %v1641 = vunpack.c.l.b16 %v954
    %v1642 = vunpack.c.l.b16 %v955
    %v1643 = vunpack.c.h.b16 %v955
    %v1644 = vunpack.c.l.b16 %v956
    %v1645 = vunpack.c.h.b16 %v956
    %v1646 = vunpack.c.l.b16 %v957
    %v1647 = vunpack.c.h.b16 %v957
    %v1648 = vunpack.c.l.b16 %v958
    %v1649 = vunpack.c.l.b16 %v959
    %v1650 = vunpack.c.h.b16 %v959
    %v1651 = vunpack.c.l.b16 %v960
    %v1652 = vunpack.c.h.b16 %v960
    %v1653 = vunpack.c.l.b16 %v961
    %v1654 = vunpack.c.h.b16 %v961
    %v1655 = vunpack.c.l.b16 %v962
    %v1656 = vunpack.c.l.b16 %v963
    %v1657 = vunpack.c.h.b16 %v963
    %v1658 = vunpack.c.l.b16 %v964
    %v1659 = vunpack.c.h.b16 %v964
    %v1660 = vunpack.c.l.b16 %v965
    %v1661 = vunpack.c.h.b16 %v965
    %v1662 = vunpack.c.l.b16 %v966
    %v1663 = vunpack.c.l.b16 %v967
    %v1664 = vunpack.c.h.b16 %v967
    %v1665 = vunpack.c.l.b16 %v968
    %v1666 = vunpack.c.h.b16 %v968
    %v1667 = vunpack.c.l.b16 %v969
    %v1668 = vunpack.c.h.b16 %v969
    %v1669 = vunpack.c.l.b16 %v970
    %v1670 = vunpack.c.l.b16 %v971
    %v1671 = vunpack.c.h.b16 %v971
    %v1672 = vunpack.c.l.b16 %v972
    %v1673 = vunpack.c.h.b16 %v972
    %v1674 = vunpack.c.l.b16 %v973
    %v1675 = vunpack.c.h.b16 %v973
    %v1676 = vunpack.c.l.b16 %v974
    %v1677 = vunpack.c.l.b16 %v975
    %v1678 = vunpack.c.h.b16 %v975
    %v1679 = vunpack.c.l.b16 %v976
    %v1680 = vunpack.c.h.b16 %v976
    %v1681 = vunpack.c.l.b16 %v977
    %v1682 = vunpack.c.h.b16 %v977
    %v1683 = vunpack.c.l.b16 %v978
    %v1684 = vunpack.c.l.b16 %v979
    %v1685 = vunpack.c.h.b16 %v979
    %v1686 = vunpack.c.l.b16 %v980
    %v1687 = vunpack.c.h.b16 %v980
    %v1688 = vunpack.c.l.b16 %v981
    %v1689 = vunpack.c.h.b16 %v981
    %v1690 = vunpack.c.l.b16 %v982
    %v1691 = vunpack.c.l.b16 %v983
    %v1692 = vunpack.c.h.b16 %v983
    %v1693 = vunpack.c.l.b16 %v984
    %v1694 = vunpack.c.h.b16 %v984
    %v1695 = vunpack.c.l.b16 %v985
    %v1696 = vunpack.c.h.b16 %v985
    %v1697 = vunpack.c.l.b16 %v986
    %v1698 = vunpack.c.l.b16 %v987
    %v1699 = vunpack.c.h.b16 %v987
    %v1700 = vunpack.c.l.b16 %v988
    %v1701 = vunpack.c.h.b16 %v988
    %v1702 = vunpack.c.l.b16 %v989
    %v1703 = vunpack.c.h.b16 %v989
    %v1704 = vunpack.c.l.b16 %v990
    %v1705 = vunpack.c.l.b16 %v991
    %v1706 = vunpack.c.h.b16 %v991
    %v1707 = vunpack.c.l.b16 %v992
    %v1708 = vunpack.c.h.b16 %v992
    %v1709 = vunpack.c.l.b16 %v993
    %v1710 = vunpack.c.h.b16 %v993
    %v1711 = vunpack.c.l.b16 %v994
    %v1712 = vunpack.c.l.b16 %v995
    %v1713 = vunpack.c.h.b16 %v995
    %v1714 = vunpack.c.l.b16 %v996
    %v1715 = vunpack.c.h.b16 %v996
    %v1716 = vunpack.c.l.b16 %v997
    %v1717 = vunpack.c.h.b16 %v997
    %v1718 = vunpack.c.l.b16 %v998
    %v1719 = vpack.c.b16 %v1278, %v1271
    %v1720 = vpack.c.b16 %v1279, %v1272
    %v1721 = vpack.c.b16 %v1280, %v1273
    %v1722 = vpack.c.b16 %v1281, %v1274
    %v1723 = vpack.c.b16 %v1282, %v1275
    %v1724 = vpack.c.b16 %v1283, %v1276
    %v1725 = vpack.c.b16 %v1284, %v1277
    %v1726 = vpack.c.b16 %v1292, %v1285
    %v1727 = vpack.c.b16 %v1293, %v1286
    %v1728 = vpack.c.b16 %v1294, %v1287
    %v1729 = vpack.c.b16 %v1295, %v1288
    %v1730 = vpack.c.b16 %v1296, %v1289
    %v1731 = vpack.c.b16 %v1297, %v1290
    %v1732 = vpack.c.b16 %v1298, %v1291
    %v1733 = vpack.c.b16 %v1306, %v1299
    %v1734 = vpack.c.b16 %v1307, %v1300
    %v1735 = vpack.c.b16 %v1308, %v1301
    %v1736 = vpack.c.b16 %v1309, %v1302
    %v1737 = vpack.c.b16 %v1310, %v1303
    %v1738 = vpack.c.b16 %v1311, %v1304
    %v1739 = vpack.c.b16 %v1312, %v1305
    %v1740 = vpack.c.b16 %v1320, %v1313
    %v1741 = vpack.c.b16 %v1321, %v1314
    %v1742 = vpack.c.b16 %v1322, %v1315
    %v1743 = vpack.c.b16 %v1323, %v1316
    %v1744 = vpack.c.b16 %v1324, %v1317
    %v1745 = vpack.c.b16 %v1325, %v1318
    %v1746 = vpack.c.b16 %v1326, %v1319
    %v1747 = vpack.c.b16 %v1334, %v1327
    %v1748 = vpack.c.b16 %v1335, %v1328
    %v1749 = vpack.c.b16 %v1336, %v1329
    %v1750 = vpack.c.b16 %v1337, %v1330
    %v1751 = vpack.c.b16 %v1338, %v1331
    %v1752 = vpack.c.b16 %v1339, %v1332
    %v1753 = vpack.c.b16 %v1340, %v1333
    %v1754 = vpack.c.b16 %v1348, %v1341
    %v1755 = vpack.c.b16 %v1349, %v1342
    %v1756 = vpack.c.b16 %v1350, %v1343
    %v1757 = vpack.c.b16 %v1351, %v1344
    %v1758 = vpack.c.b16 %v1352, %v1345
    %v1759 = vpack.c.b16 %v1353, %v1346
    %v1760 = vpack.c.b16 %v1354, %v1347
    %v1761 = vpack.c.b16 %v1362, %v1355
    %v1762 = vpack.c.b16 %v1363, %v1356
    %v1763 = vpack.c.b16 %v1364, %v1357
    %v1764 = vpack.c.b16 %v1365, %v1358
    %v1765 = vpack.c.b16 %v1366, %v1359
    %v1766 = vpack.c.b16 %v1367, %v1360
    %v1767 = vpack.c.b16 %v1368, %v1361
    %v1768 = vpack.c.b16 %v1376, %v1369
    %v1769 = vpack.c.b16 %v1377, %v1370
    %v1770 = vpack.c.b16 %v1378, %v1371
    %v1771 = vpack.c.b16 %v1379, %v1372
    %v1772 = vpack.c.b16 %v1380, %v1373
    %v1773 = vpack.c.b16 %v1381, %v1374
    %v1774 = vpack.c.b16 %v1382, %v1375
    %v1775 = vpack.c.b16 %v1390, %v1383
    %v1776 = vpack.c.b16 %v1391, %v1384
    %v1777 = vpack.c.b16 %v1392, %v1385
    %v1778 = vpack.c.b16 %v1393, %v1386
    %v1779 = vpack.c.b16 %v1394, %v1387
    %v1780 = vpack.c.b16 %v1395, %v1388
    %v1781 = vpack.c.b16 %v1396, %v1389
    %v1782 = vpack.c.b16 %v1404, %v1397
    %v1783 = vpack.c.b16 %v1405, %v1398
    %v1784 = vpack.c.b16 %v1406, %v1399
    %v1785 = vpack.c.b16 %v1407, %v1400
    %v1786 = vpack.c.b16 %v1408, %v1401
    %v1787 = vpack.c.b16 %v1409, %v1402
    %v1788 = vpack.c.b16 %v1410, %v1403
    %v1789 = vpack.c.b16 %v1418, %v1411
    %v1790 = vpack.c.b16 %v1419, %v1412
    %v1791 = vpack.c.b16 %v1420, %v1413
    %v1792 = vpack.c.b16 %v1421, %v1414
    %v1793 = vpack.c.b16 %v1422, %v1415
    %v1794 = vpack.c.b16 %v1423, %v1416
    %v1795 = vpack.c.b16 %v1424, %v1417
    %v1796 = vpack.c.b16 %v1432, %v1425
    %v1797 = vpack.c.b16 %v1433, %v1426
    %v1798 = vpack.c.b16 %v1434, %v1427
    %v1799 = vpack.c.b16 %v1435, %v1428
    %v1800 = vpack.c.b16 %v1436, %v1429
    %v1801 = vpack.c.b16 %v1437, %v1430
    %v1802 = vpack.c.b16 %v1438, %v1431
    %v1803 = vpack.c.b16 %v1446, %v1439
    %v1804 = vpack.c.b16 %v1447, %v1440
    %v1805 = vpack.c.b16 %v1448, %v1441
    %v1806 = vpack.c.b16 %v1449, %v1442
    %v1807 = vpack.c.b16 %v1450, %v1443
    %v1808 = vpack.c.b16 %v1451, %v1444
    %v1809 = vpack.c.b16 %v1452, %v1445
    %v1810 = vpack.c.b16 %v1460, %v1453
    %v1811 = vpack.c.b16 %v1461, %v1454
    %v1812 = vpack.c.b16 %v1462, %v1455
    %v1813 = vpack.c.b16 %v1463, %v1456
    %v1814 = vpack.c.b16 %v1464, %v1457
    %v1815 = vpack.c.b16 %v1465, %v1458
    %v1816 = vpack.c.b16 %v1466, %v1459
    %v1817 = vpack.c.b16 %v1474, %v1467
    %v1818 = vpack.c.b16 %v1475, %v1468
    %v1819 = vpack.c.b16 %v1476, %v1469
    %v1820 = vpack.c.b16 %v1477, %v1470
    %v1821 = vpack.c.b16 %v1478, %v1471
    %v1822 = vpack.c.b16 %v1479, %v1472
    %v1823 = vpack.c.b16 %v1480, %v1473
    %v1824 = vpack.c.b16 %v1488, %v1481
    %v1825 = vpack.c.b16 %v1489, %v1482
    %v1826 = vpack.c.b16 %v1490, %v1483
    %v1827 = vpack.c.b16 %v1491, %v1484
    %v1828 = vpack.c.b16 %v1492, %v1485
    %v1829 = vpack.c.b16 %v1493, %v1486
    %v1830 = vpack.c.b16 %v1494, %v1487
    %v1831 = vpack.c.b16 %v1502, %v1495
    %v1832 = vpack.c.b16 %v1503, %v1496
    %v1833 = vpack.c.b16 %v1504, %v1497
    %v1834 = vpack.c.b16 %v1505, %v1498
    %v1835 = vpack.c.b16 %v1506, %v1499
    %v1836 = vpack.c.b16 %v1507, %v1500
    %v1837 = vpack.c.b16 %v1508, %v1501
    %v1838 = vpack.c.b16 %v1516, %v1509
    %v1839 = vpack.c.b16 %v1517, %v1510
    %v1840 = vpack.c.b16 %v1518, %v1511
    %v1841 = vpack.c.b16 %v1519, %v1512
    %v1842 = vpack.c.b16 %v1520, %v1513
    %v1843 = vpack.c.b16 %v1521, %v1514
    %v1844 = vpack.c.b16 %v1522, %v1515
    %v1845 = vpack.c.b16 %v1530, %v1523
    %v1846 = vpack.c.b16 %v1531, %v1524
    %v1847 = vpack.c.b16 %v1532, %v1525
    %v1848 = vpack.c.b16 %v1533, %v1526
    %v1849 = vpack.c.b16 %v1534, %v1527
    %v1850 = vpack.c.b16 %v1535, %v1528
    %v1851 = vpack.c.b16 %v1536, %v1529
    %v1852 = vpack.c.b16 %v1544, %v1537
    %v1853 = vpack.c.b16 %v1545, %v1538
    %v1854 = vpack.c.b16 %v1546, %v1539
    %v1855 = vpack.c.b16 %v1547, %v1540
    %v1856 = vpack.c.b16 %v1548, %v1541
    %v1857 = vpack.c.b16 %v1549, %v1542
    %v1858 = vpack.c.b16 %v1550, %v1543
    %v1859 = vpack.c.b16 %v1558, %v1551
    %v1860 = vpack.c.b16 %v1559, %v1552
    %v1861 = vpack.c.b16 %v1560, %v1553
    %v1862 = vpack.c.b16 %v1561, %v1554
    %v1863 = vpack.c.b16 %v1562, %v1555
    %v1864 = vpack.c.b16 %v1563, %v1556
    %v1865 = vpack.c.b16 %v1564, %v1557
    %v1866 = vpack.c.b16 %v1572, %v1565
    %v1867 = vpack.c.b16 %v1573, %v1566
    %v1868 = vpack.c.b16 %v1574, %v1567
    %v1869 = vpack.c.b16 %v1575, %v1568
    %v1870 = vpack.c.b16 %v1576, %v1569
    %v1871 = vpack.c.b16 %v1577, %v1570
    %v1872 = vpack.c.b16 %v1578, %v1571
    %v1873 = vpack.c.b16 %v1586, %v1579
    %v1874 = vpack.c.b16 %v1587, %v1580
    %v1875 = vpack.c.b16 %v1588, %v1581
    %v1876 = vpack.c.b16 %v1589, %v1582
    %v1877 = vpack.c.b16 %v1590, %v1583
    %v1878 = vpack.c.b16 %v1591, %v1584
    %v1879 = vpack.c.b16 %v1592, %v1585
    %v1880 = vpack.c.b16 %v1600, %v1593
    %v1881 = vpack.c.b16 %v1601, %v1594
    %v1882 = vpack.c.b16 %v1602, %v1595
    %v1883 = vpack.c.b16 %v1603, %v1596
    %v1884 = vpack.c.b16 %v1604, %v1597
    %v1885 = vpack.c.b16 %v1605, %v1598
    %v1886 = vpack.c.b16 %v1606, %v1599
    %v1887 = vpack.c.b16 %v1614, %v1607
    %v1888 = vpack.c.b16 %v1615, %v1608
    %v1889 = vpack.c.b16 %v1616, %v1609
    %v1890 = vpack.c.b16 %v1617, %v1610
    %v1891 = vpack.c.b16 %v1618, %v1611
    %v1892 = vpack.c.b16 %v1619, %v1612
    %v1893 = vpack.c.b16 %v1620, %v1613
    %v1894 = vpack.c.b16 %v1628, %v1621
    %v1895 = vpack.c.b16 %v1629, %v1622
    %v1896 = vpack.c.b16 %v1630, %v1623
    %v1897 = vpack.c.b16 %v1631, %v1624
    %v1898 = vpack.c.b16 %v1632, %v1625
    %v1899 = vpack.c.b16 %v1633, %v1626
    %v1900 = vpack.c.b16 %v1634, %v1627
    %v1901 = vpack.c.b16 %v1642, %v1635
    %v1902 = vpack.c.b16 %v1643, %v1636
    %v1903 = vpack.c.b16 %v1644, %v1637
    %v1904 = vpack.c.b16 %v1645, %v1638
    %v1905 = vpack.c.b16 %v1646, %v1639
    %v1906 = vpack.c.b16 %v1647, %v1640
    %v1907 = vpack.c.b16 %v1648, %v1641
    %v1908 = vpack.c.b16 %v1656, %v1649
    %v1909 = vpack.c.b16 %v1657, %v1650
    %v1910 = vpack.c.b16 %v1658, %v1651
    %v1911 = vpack.c.b16 %v1659, %v1652
    %v1912 = vpack.c.b16 %v1660, %v1653
    %v1913 = vpack.c.b16 %v1661, %v1654
    %v1914 = vpack.c.b16 %v1662, %v1655
    %v1915 = vpack.c.b16 %v1670, %v1663
    %v1916 = vpack.c.b16 %v1671, %v1664
    %v1917 = vpack.c.b16 %v1672, %v1665
    %v1918 = vpack.c.b16 %v1673, %v1666
    %v1919 = vpack.c.b16 %v1674, %v1667
    %v1920 = vpack.c.b16 %v1675, %v1668
    %v1921 = vpack.c.b16 %v1676, %v1669
    %v1922 = vpack.c.b16 %v1684, %v1677
    %v1923 = vpack.c.b16 %v1685, %v1678
    %v1924 = vpack.c.b16 %v1686, %v1679
    %v1925 = vpack.c.b16 %v1687, %v1680
    %v1926 = vpack.c.b16 %v1688, %v1681
    %v1927 = vpack.c.b16 %v1689, %v1682
    %v1928 = vpack.c.b16 %v1690, %v1683
    %v1929 = vpack.c.b16 %v1698, %v1691
    %v1930 = vpack.c.b16 %v1699, %v1692
    %v1931 = vpack.c.b16 %v1700, %v1693
    %v1932 = vpack.c.b16 %v1701, %v1694
    %v1933 = vpack.c.b16 %v1702, %v1695
    %v1934 = vpack.c.b16 %v1703, %v1696
    %v1935 = vpack.c.b16 %v1704, %v1697
    %v1936 = vpack.c.b16 %v1712, %v1705
    %v1937 = vpack.c.b16 %v1713, %v1706
    %v1938 = vpack.c.b16 %v1714, %v1707
    %v1939 = vpack.c.b16 %v1715, %v1708
    %v1940 = vpack.c.b16 %v1716, %v1709
    %v1941 = vpack.c.b16 %v1717, %v1710
    %v1942 = vpack.c.b16 %v1718, %v1711
    %2167 = vmatpush.bf16.msra.mxu0 %v1768
    %2168 = vmatpush.bf16.msra.mxu0 %v1761
    %2169 = vmatpush.bf16.msra.mxu0 %v1754
    %2170 = vmatpush.bf16.msra.mxu0 %v1747
    %2171 = vmatpush.bf16.msra.mxu0 %v1740
    %2172 = vmatpush.bf16.msra.mxu0 %v1733
    %2173 = vmatpush.bf16.msra.mxu0 %v1726
    %2174 = vmatpush.bf16.msra.mxu0 %v1719
    %2175 = vmatmul.bf16.gmra.mxu0 %v739
    %v2176 = vpop.f32.mrf.mxu0
    %v2177 = vadd.f32 %v1001, %v2176
    %v2178 = vpop.f32.mrf.mxu0
    %2179 = vdwg.mxu0
    %2180 = vmatpush.bf16.msra.mxu0 %v1824
    %2181 = vmatpush.bf16.msra.mxu0 %v1817
    %2182 = vmatpush.bf16.msra.mxu0 %v1810
    %2183 = vmatpush.bf16.msra.mxu0 %v1803
    %2184 = vmatpush.bf16.msra.mxu0 %v1796
    %2185 = vmatpush.bf16.msra.mxu0 %v1789
    %2186 = vmatpush.bf16.msra.mxu0 %v1782
    %2187 = vmatpush.bf16.msra.mxu0 %v1775
    %2188 = vmatmul.bf16.gmra.mxu0 %v740
    %v2189 = vpop.f32.mrf.mxu0
    %v2190 = vadd.f32 %v2177, %v2189
    %v2191 = vpop.f32.mrf.mxu0
    %2192 = vdwg.mxu0
    %2193 = vmatpush.bf16.msra.mxu0 %v1880
    %2194 = vmatpush.bf16.msra.mxu0 %v1873
    %2195 = vmatpush.bf16.msra.mxu0 %v1866
    %2196 = vmatpush.bf16.msra.mxu0 %v1859
    %2197 = vmatpush.bf16.msra.mxu0 %v1852
    %2198 = vmatpush.bf16.msra.mxu0 %v1845
    %2199 = vmatpush.bf16.msra.mxu0 %v1838
    %2200 = vmatpush.bf16.msra.mxu0 %v1831
    %2201 = vmatmul.bf16.gmra.mxu0 %v741
    %v2202 = vpop.f32.mrf.mxu0
    %v2203 = vadd.f32 %v2190, %v2202
    %v2204 = vpop.f32.mrf.mxu0
    %2205 = vdwg.mxu0
    %2206 = vmatpush.bf16.msra.mxu0 %v1936
    %2207 = vmatpush.bf16.msra.mxu0 %v1929
    %2208 = vmatpush.bf16.msra.mxu0 %v1922
    %2209 = vmatpush.bf16.msra.mxu0 %v1915
    %2210 = vmatpush.bf16.msra.mxu0 %v1908
    %2211 = vmatpush.bf16.msra.mxu0 %v1901
    %2212 = vmatpush.bf16.msra.mxu0 %v1894
    %2213 = vmatpush.bf16.msra.mxu0 %v1887
    %2214 = vmatmul.bf16.gmra.mxu0 %v742
    %v2215 = vpop.f32.mrf.mxu0
    %v2216 = vadd.f32 %v2203, %v2215
    %v2217 = vpop.f32.mrf.mxu0
    %2218 = vdwg.mxu0
    %2219 = vmatpush.bf16.msra.mxu0 %v1769
    %2220 = vmatpush.bf16.msra.mxu0 %v1762
    %2221 = vmatpush.bf16.msra.mxu0 %v1755
    %2222 = vmatpush.bf16.msra.mxu0 %v1748
    %2223 = vmatpush.bf16.msra.mxu0 %v1741
    %2224 = vmatpush.bf16.msra.mxu0 %v1734
    %2225 = vmatpush.bf16.msra.mxu0 %v1727
    %2226 = vmatpush.bf16.msra.mxu0 %v1720
    %2227 = vmatmul.bf16.gmra.mxu0 %v739
    %v2228 = vpop.f32.mrf.mxu0
    %v2229 = vadd.f32 %v1002, %v2228
    %v2230 = vpop.f32.mrf.mxu0
    %2231 = vdwg.mxu0
    %2232 = vmatpush.bf16.msra.mxu0 %v1825
    %2233 = vmatpush.bf16.msra.mxu0 %v1818
    %2234 = vmatpush.bf16.msra.mxu0 %v1811
    %2235 = vmatpush.bf16.msra.mxu0 %v1804
    %2236 = vmatpush.bf16.msra.mxu0 %v1797
    %2237 = vmatpush.bf16.msra.mxu0 %v1790
    %2238 = vmatpush.bf16.msra.mxu0 %v1783
    %2239 = vmatpush.bf16.msra.mxu0 %v1776
    %2240 = vmatmul.bf16.gmra.mxu0 %v740
    %v2241 = vpop.f32.mrf.mxu0
    %v2242 = vadd.f32 %v2229, %v2241
    %v2243 = vpop.f32.mrf.mxu0
    %2244 = vdwg.mxu0
    %2245 = vmatpush.bf16.msra.mxu0 %v1881
    %2246 = vmatpush.bf16.msra.mxu0 %v1874
    %2247 = vmatpush.bf16.msra.mxu0 %v1867
    %2248 = vmatpush.bf16.msra.mxu0 %v1860
    %2249 = vmatpush.bf16.msra.mxu0 %v1853
    %2250 = vmatpush.bf16.msra.mxu0 %v1846
    %2251 = vmatpush.bf16.msra.mxu0 %v1839
    %2252 = vmatpush.bf16.msra.mxu0 %v1832
    %2253 = vmatmul.bf16.gmra.mxu0 %v741
    %v2254 = vpop.f32.mrf.mxu0
    %v2255 = vadd.f32 %v2242, %v2254
    %v2256 = vpop.f32.mrf.mxu0
    %2257 = vdwg.mxu0
    %2258 = vmatpush.bf16.msra.mxu0 %v1937
    %2259 = vmatpush.bf16.msra.mxu0 %v1930
    %2260 = vmatpush.bf16.msra.mxu0 %v1923
    %2261 = vmatpush.bf16.msra.mxu0 %v1916
    %2262 = vmatpush.bf16.msra.mxu0 %v1909
    %2263 = vmatpush.bf16.msra.mxu0 %v1902
    %2264 = vmatpush.bf16.msra.mxu0 %v1895
    %2265 = vmatpush.bf16.msra.mxu0 %v1888
    %2266 = vmatmul.bf16.gmra.mxu0 %v742
    %v2267 = vpop.f32.mrf.mxu0
    %v2268 = vadd.f32 %v2255, %v2267
    %v2269 = vpop.f32.mrf.mxu0
    %2270 = vdwg.mxu0
    %2271 = vmatpush.bf16.msra.mxu0 %v1770
    %2272 = vmatpush.bf16.msra.mxu0 %v1763
    %2273 = vmatpush.bf16.msra.mxu0 %v1756
    %2274 = vmatpush.bf16.msra.mxu0 %v1749
    %2275 = vmatpush.bf16.msra.mxu0 %v1742
    %2276 = vmatpush.bf16.msra.mxu0 %v1735
    %2277 = vmatpush.bf16.msra.mxu0 %v1728
    %2278 = vmatpush.bf16.msra.mxu0 %v1721
    %2279 = vmatmul.bf16.gmra.mxu0 %v739
    %v2280 = vpop.f32.mrf.mxu0
    %v2281 = vadd.f32 %v1003, %v2280
    %v2282 = vpop.f32.mrf.mxu0
    %2283 = vdwg.mxu0
    %2284 = vmatpush.bf16.msra.mxu0 %v1826
    %2285 = vmatpush.bf16.msra.mxu0 %v1819
    %2286 = vmatpush.bf16.msra.mxu0 %v1812
    %2287 = vmatpush.bf16.msra.mxu0 %v1805
    %2288 = vmatpush.bf16.msra.mxu0 %v1798
    %2289 = vmatpush.bf16.msra.mxu0 %v1791
    %2290 = vmatpush.bf16.msra.mxu0 %v1784
    %2291 = vmatpush.bf16.msra.mxu0 %v1777
    %2292 = vmatmul.bf16.gmra.mxu0 %v740
    %v2293 = vpop.f32.mrf.mxu0
    %v2294 = vadd.f32 %v2281, %v2293
    %v2295 = vpop.f32.mrf.mxu0
    %2296 = vdwg.mxu0
    %2297 = vmatpush.bf16.msra.mxu0 %v1882
    %2298 = vmatpush.bf16.msra.mxu0 %v1875
    %2299 = vmatpush.bf16.msra.mxu0 %v1868
    %2300 = vmatpush.bf16.msra.mxu0 %v1861
    %2301 = vmatpush.bf16.msra.mxu0 %v1854
    %2302 = vmatpush.bf16.msra.mxu0 %v1847
    %2303 = vmatpush.bf16.msra.mxu0 %v1840
    %2304 = vmatpush.bf16.msra.mxu0 %v1833
    %2305 = vmatmul.bf16.gmra.mxu0 %v741
    %v2306 = vpop.f32.mrf.mxu0
    %v2307 = vadd.f32 %v2294, %v2306
    %v2308 = vpop.f32.mrf.mxu0
    %2309 = vdwg.mxu0
    %2310 = vmatpush.bf16.msra.mxu0 %v1938
    %2311 = vmatpush.bf16.msra.mxu0 %v1931
    %2312 = vmatpush.bf16.msra.mxu0 %v1924
    %2313 = vmatpush.bf16.msra.mxu0 %v1917
    %2314 = vmatpush.bf16.msra.mxu0 %v1910
    %2315 = vmatpush.bf16.msra.mxu0 %v1903
    %2316 = vmatpush.bf16.msra.mxu0 %v1896
    %2317 = vmatpush.bf16.msra.mxu0 %v1889
    %2318 = vmatmul.bf16.gmra.mxu0 %v742
    %v2319 = vpop.f32.mrf.mxu0
    %v2320 = vadd.f32 %v2307, %v2319
    %v2321 = vpop.f32.mrf.mxu0
    %2322 = vdwg.mxu0
    %2323 = vmatpush.bf16.msra.mxu0 %v1771
    %2324 = vmatpush.bf16.msra.mxu0 %v1764
    %2325 = vmatpush.bf16.msra.mxu0 %v1757
    %2326 = vmatpush.bf16.msra.mxu0 %v1750
    %2327 = vmatpush.bf16.msra.mxu0 %v1743
    %2328 = vmatpush.bf16.msra.mxu0 %v1736
    %2329 = vmatpush.bf16.msra.mxu0 %v1729
    %2330 = vmatpush.bf16.msra.mxu0 %v1722
    %2331 = vmatmul.bf16.gmra.mxu0 %v739
    %v2332 = vpop.f32.mrf.mxu0
    %v2333 = vadd.f32 %v1004, %v2332
    %v2334 = vpop.f32.mrf.mxu0
    %2335 = vdwg.mxu0
    %2336 = vmatpush.bf16.msra.mxu0 %v1827
    %2337 = vmatpush.bf16.msra.mxu0 %v1820
    %2338 = vmatpush.bf16.msra.mxu0 %v1813
    %2339 = vmatpush.bf16.msra.mxu0 %v1806
    %2340 = vmatpush.bf16.msra.mxu0 %v1799
    %2341 = vmatpush.bf16.msra.mxu0 %v1792
    %2342 = vmatpush.bf16.msra.mxu0 %v1785
    %2343 = vmatpush.bf16.msra.mxu0 %v1778
    %2344 = vmatmul.bf16.gmra.mxu0 %v740
    %v2345 = vpop.f32.mrf.mxu0
    %v2346 = vadd.f32 %v2333, %v2345
    %v2347 = vpop.f32.mrf.mxu0
    %2348 = vdwg.mxu0
    %2349 = vmatpush.bf16.msra.mxu0 %v1883
    %2350 = vmatpush.bf16.msra.mxu0 %v1876
    %2351 = vmatpush.bf16.msra.mxu0 %v1869
    %2352 = vmatpush.bf16.msra.mxu0 %v1862
    %2353 = vmatpush.bf16.msra.mxu0 %v1855
    %2354 = vmatpush.bf16.msra.mxu0 %v1848
    %2355 = vmatpush.bf16.msra.mxu0 %v1841
    %2356 = vmatpush.bf16.msra.mxu0 %v1834
    %2357 = vmatmul.bf16.gmra.mxu0 %v741
    %v2358 = vpop.f32.mrf.mxu0
    %v2359 = vadd.f32 %v2346, %v2358
    %v2360 = vpop.f32.mrf.mxu0
    %2361 = vdwg.mxu0
    %2362 = vmatpush.bf16.msra.mxu0 %v1939
    %2363 = vmatpush.bf16.msra.mxu0 %v1932
    %2364 = vmatpush.bf16.msra.mxu0 %v1925
    %2365 = vmatpush.bf16.msra.mxu0 %v1918
    %2366 = vmatpush.bf16.msra.mxu0 %v1911
    %2367 = vmatpush.bf16.msra.mxu0 %v1904
    %2368 = vmatpush.bf16.msra.mxu0 %v1897
    %2369 = vmatpush.bf16.msra.mxu0 %v1890
    %2370 = vmatmul.bf16.gmra.mxu0 %v742
    %v2371 = vpop.f32.mrf.mxu0
    %v2372 = vadd.f32 %v2359, %v2371
    %v2373 = vpop.f32.mrf.mxu0
    %2374 = vdwg.mxu0
    %2375 = vmatpush.bf16.msra.mxu0 %v1772
    %2376 = vmatpush.bf16.msra.mxu0 %v1765
    %2377 = vmatpush.bf16.msra.mxu0 %v1758
    %2378 = vmatpush.bf16.msra.mxu0 %v1751
    %2379 = vmatpush.bf16.msra.mxu0 %v1744
    %2380 = vmatpush.bf16.msra.mxu0 %v1737
    %2381 = vmatpush.bf16.msra.mxu0 %v1730
    %2382 = vmatpush.bf16.msra.mxu0 %v1723
    %2383 = vmatmul.bf16.gmra.mxu0 %v739
    %v2384 = vpop.f32.mrf.mxu0
    %v2385 = vadd.f32 %v1005, %v2384
    %v2386 = vpop.f32.mrf.mxu0
    %2387 = vdwg.mxu0
    %2388 = vmatpush.bf16.msra.mxu0 %v1828
    %2389 = vmatpush.bf16.msra.mxu0 %v1821
    %2390 = vmatpush.bf16.msra.mxu0 %v1814
    %2391 = vmatpush.bf16.msra.mxu0 %v1807
    %2392 = vmatpush.bf16.msra.mxu0 %v1800
    %2393 = vmatpush.bf16.msra.mxu0 %v1793
    %2394 = vmatpush.bf16.msra.mxu0 %v1786
    %2395 = vmatpush.bf16.msra.mxu0 %v1779
    %2396 = vmatmul.bf16.gmra.mxu0 %v740
    %v2397 = vpop.f32.mrf.mxu0
    %v2398 = vadd.f32 %v2385, %v2397
    %v2399 = vpop.f32.mrf.mxu0
    %2400 = vdwg.mxu0
    %2401 = vmatpush.bf16.msra.mxu0 %v1884
    %2402 = vmatpush.bf16.msra.mxu0 %v1877
    %2403 = vmatpush.bf16.msra.mxu0 %v1870
    %2404 = vmatpush.bf16.msra.mxu0 %v1863
    %2405 = vmatpush.bf16.msra.mxu0 %v1856
    %2406 = vmatpush.bf16.msra.mxu0 %v1849
    %2407 = vmatpush.bf16.msra.mxu0 %v1842
    %2408 = vmatpush.bf16.msra.mxu0 %v1835
    %2409 = vmatmul.bf16.gmra.mxu0 %v741
    %v2410 = vpop.f32.mrf.mxu0
    %v2411 = vadd.f32 %v2398, %v2410
    %v2412 = vpop.f32.mrf.mxu0
    %2413 = vdwg.mxu0
    %2414 = vmatpush.bf16.msra.mxu0 %v1940
    %2415 = vmatpush.bf16.msra.mxu0 %v1933
    %2416 = vmatpush.bf16.msra.mxu0 %v1926
    %2417 = vmatpush.bf16.msra.mxu0 %v1919
    %2418 = vmatpush.bf16.msra.mxu0 %v1912
    %2419 = vmatpush.bf16.msra.mxu0 %v1905
    %2420 = vmatpush.bf16.msra.mxu0 %v1898
    %2421 = vmatpush.bf16.msra.mxu0 %v1891
    %2422 = vmatmul.bf16.gmra.mxu0 %v742
    %v2423 = vpop.f32.mrf.mxu0
    %v2424 = vadd.f32 %v2411, %v2423
    %v2425 = vpop.f32.mrf.mxu0
    %2426 = vdwg.mxu0
    %2427 = vmatpush.bf16.msra.mxu0 %v1773
    %2428 = vmatpush.bf16.msra.mxu0 %v1766
    %2429 = vmatpush.bf16.msra.mxu0 %v1759
    %2430 = vmatpush.bf16.msra.mxu0 %v1752
    %2431 = vmatpush.bf16.msra.mxu0 %v1745
    %2432 = vmatpush.bf16.msra.mxu0 %v1738
    %2433 = vmatpush.bf16.msra.mxu0 %v1731
    %2434 = vmatpush.bf16.msra.mxu0 %v1724
    %2435 = vmatmul.bf16.gmra.mxu0 %v739
    %v2436 = vpop.f32.mrf.mxu0
    %v2437 = vadd.f32 %v1006, %v2436
    %v2438 = vpop.f32.mrf.mxu0
    %2439 = vdwg.mxu0
    %2440 = vmatpush.bf16.msra.mxu0 %v1829
    %2441 = vmatpush.bf16.msra.mxu0 %v1822
    %2442 = vmatpush.bf16.msra.mxu0 %v1815
    %2443 = vmatpush.bf16.msra.mxu0 %v1808
    %2444 = vmatpush.bf16.msra.mxu0 %v1801
    %2445 = vmatpush.bf16.msra.mxu0 %v1794
    %2446 = vmatpush.bf16.msra.mxu0 %v1787
    %2447 = vmatpush.bf16.msra.mxu0 %v1780
    %2448 = vmatmul.bf16.gmra.mxu0 %v740
    %v2449 = vpop.f32.mrf.mxu0
    %v2450 = vadd.f32 %v2437, %v2449
    %v2451 = vpop.f32.mrf.mxu0
    %2452 = vdwg.mxu0
    %2453 = vmatpush.bf16.msra.mxu0 %v1885
    %2454 = vmatpush.bf16.msra.mxu0 %v1878
    %2455 = vmatpush.bf16.msra.mxu0 %v1871
    %2456 = vmatpush.bf16.msra.mxu0 %v1864
    %2457 = vmatpush.bf16.msra.mxu0 %v1857
    %2458 = vmatpush.bf16.msra.mxu0 %v1850
    %2459 = vmatpush.bf16.msra.mxu0 %v1843
    %2460 = vmatpush.bf16.msra.mxu0 %v1836
    %2461 = vmatmul.bf16.gmra.mxu0 %v741
    %v2462 = vpop.f32.mrf.mxu0
    %v2463 = vadd.f32 %v2450, %v2462
    %v2464 = vpop.f32.mrf.mxu0
    %2465 = vdwg.mxu0
    %2466 = vmatpush.bf16.msra.mxu0 %v1941
    %2467 = vmatpush.bf16.msra.mxu0 %v1934
    %2468 = vmatpush.bf16.msra.mxu0 %v1927
    %2469 = vmatpush.bf16.msra.mxu0 %v1920
    %2470 = vmatpush.bf16.msra.mxu0 %v1913
    %2471 = vmatpush.bf16.msra.mxu0 %v1906
    %2472 = vmatpush.bf16.msra.mxu0 %v1899
    %2473 = vmatpush.bf16.msra.mxu0 %v1892
    %2474 = vmatmul.bf16.gmra.mxu0 %v742
    %v2475 = vpop.f32.mrf.mxu0
    %v2476 = vadd.f32 %v2463, %v2475
    %v2477 = vpop.f32.mrf.mxu0
    %2478 = vdwg.mxu0
    %2479 = vmatpush.bf16.msra.mxu0 %v1774
    %2480 = vmatpush.bf16.msra.mxu0 %v1767
    %2481 = vmatpush.bf16.msra.mxu0 %v1760
    %2482 = vmatpush.bf16.msra.mxu0 %v1753
    %2483 = vmatpush.bf16.msra.mxu0 %v1746
    %2484 = vmatpush.bf16.msra.mxu0 %v1739
    %2485 = vmatpush.bf16.msra.mxu0 %v1732
    %2486 = vmatpush.bf16.msra.mxu0 %v1725
    %2487 = vmatmul.bf16.gmra.mxu0 %v739
    %v2488 = vpop.f32.mrf.mxu0
    %v2489 = vadd.f32 %v1007, %v2488
    %v2490 = vpop.f32.mrf.mxu0
    %2491 = vdwg.mxu0
    %2492 = vmatpush.bf16.msra.mxu0 %v1830
    %2493 = vmatpush.bf16.msra.mxu0 %v1823
    %2494 = vmatpush.bf16.msra.mxu0 %v1816
    %2495 = vmatpush.bf16.msra.mxu0 %v1809
    %2496 = vmatpush.bf16.msra.mxu0 %v1802
    %2497 = vmatpush.bf16.msra.mxu0 %v1795
    %2498 = vmatpush.bf16.msra.mxu0 %v1788
    %2499 = vmatpush.bf16.msra.mxu0 %v1781
    %2500 = vmatmul.bf16.gmra.mxu0 %v740
    %v2501 = vpop.f32.mrf.mxu0
    %v2502 = vadd.f32 %v2489, %v2501
    %v2503 = vpop.f32.mrf.mxu0
    %2504 = vdwg.mxu0
    %2505 = vmatpush.bf16.msra.mxu0 %v1886
    %2506 = vmatpush.bf16.msra.mxu0 %v1879
    %2507 = vmatpush.bf16.msra.mxu0 %v1872
    %2508 = vmatpush.bf16.msra.mxu0 %v1865
    %2509 = vmatpush.bf16.msra.mxu0 %v1858
    %2510 = vmatpush.bf16.msra.mxu0 %v1851
    %2511 = vmatpush.bf16.msra.mxu0 %v1844
    %2512 = vmatpush.bf16.msra.mxu0 %v1837
    %2513 = vmatmul.bf16.gmra.mxu0 %v741
    %v2514 = vpop.f32.mrf.mxu0
    %v2515 = vadd.f32 %v2502, %v2514
    %v2516 = vpop.f32.mrf.mxu0
    %2517 = vdwg.mxu0
    %2518 = vmatpush.bf16.msra.mxu0 %v1942
    %2519 = vmatpush.bf16.msra.mxu0 %v1935
    %2520 = vmatpush.bf16.msra.mxu0 %v1928
    %2521 = vmatpush.bf16.msra.mxu0 %v1921
    %2522 = vmatpush.bf16.msra.mxu0 %v1914
    %2523 = vmatpush.bf16.msra.mxu0 %v1907
    %2524 = vmatpush.bf16.msra.mxu0 %v1900
    %2525 = vmatpush.bf16.msra.mxu0 %v1893
    %2526 = vmatmul.bf16.gmra.mxu0 %v742
    %v2527 = vpop.f32.mrf.mxu0
    %v2528 = vadd.f32 %v2515, %v2527
    %v2529 = vpop.f32.mrf.mxu0
    %2530 = vdwg.mxu0
    %v2531 = vtanh.pop %v2216
    %v2532 = vtanh.pop %v2268
    %v2533 = vtanh.pop %v2320
    %v2534 = vtanh.pop %v2372
    %v2535 = vtanh.pop %v2424
    %v2536 = vtanh.pop %v2476
    %v2537 = vtanh.pop %v2528
    %2538 = vst [vmem:[#allocation2] sm:$0xff] %v2531
    %2539 = vst [vmem:[#allocation2 + $0x8] sm:$0xff] %v2532
    %2540 = vst [vmem:[#allocation2 + $0x10] sm:$0xff] %v2533
    %2541 = vst [vmem:[#allocation2 + $0x18] sm:$0xff] %v2534
    %2542 = vst [vmem:[#allocation2 + $0x20] sm:$0xff] %v2535
    %2543 = vst [vmem:[#allocation2 + $0x28] sm:$0xff] %v2536
    %vm2544 = vcmask 130048
    %2545 = vst.msk [vmem:[#allocation2 + $0x30] sm:$0xff] %vm2544, %v2537
    // Predicated region
    $region38: #{generator_forward.1} parent=1 // pred_check
      _
    $region39: #{generator_forward.1} parent=1 // pred_check_branch
      %2547 = sbr.rel (0) target = $region41
    $region40: #{generator_forward.1} parent=1 // pred_region
      %2549 = vsyncadd [#allocation3], 0
      %s2551 = sshll.u32 [#allocation2], 4
      %s2552 = int_to_ptr.vmem [resolvable:$true] %s2551
      %s2553 = sshll.u32 %s9, 4
      %s2554 = int_to_ptr.hbm [resolvable:$true] %s2553
      %2556 = dma.vmem_to_hbm [thread:$0]  %s2552, 896, %s2554, [#allocation3]
    $region41: #{generator_forward.1} parent=1 // pred_fallthru
      _
    // Predicated region
    $region42: #{generator_forward.1} parent=1 // pred_check
      _
    $region43: #{generator_forward.1} parent=1 // pred_check_branch
      %2558 = sbr.rel (0) target = $region45
    $region44: #{generator_forward.1} parent=1 // pred_region
      %2560 = dma.done [#allocation3], 896
    $region45: #{generator_forward.1} parent=1 // pred_fallthru
      _
    %2561 = vsyncpa [#allocation3], 1

</llo_original>
